<compile_context>
chip_gen: v7x
topology: tpu7x:2x2x1
jax: 0.10.0
libtpu: 0.0.40
codegen_flags: <defaults>
</compile_context>

<pallas_src>
import functools

import jax
import jax.numpy as jnp
from jax import lax
from jax.experimental import pallas as pl
from jax.experimental.pallas import tpu as pltpu


# ----------------------------- shared activation -----------------------------
def _apply_act(y, act):
    if act is None:
        return y
    act = act.lower()
    if act == "relu":
        return jnp.maximum(y, 0.0)
    if act == "silu":
        return y * jax.nn.sigmoid(y)
    if act == "gelu":
        # exact (erf) form == torch.nn.GELU default
        return jax.nn.gelu(y, approximate=False)
    if act == "leaky_relu":
        return jnp.where(y >= 0.0, y, 0.01 * y)
    raise ValueError(f"unsupported activation: {act}")


# ------------------------------- Pallas kernel --------------------------------
def _conv_bn_act_kernel(x_ref, w_ref, b_ref, o_ref, *, k, stride, tile_oh, ow,
                        act, mxu_dtype):
    # x_ref: (Hp, Wp, Cin)          padded NHWC image of this batch element (f32)
    # w_ref: (k, k, Cin, Cout_p)    BN-scale-folded conv weight (bf16)
    # b_ref: (1, Cout_p)            BN bias (f32)
    # o_ref: (tile_oh*OW, Cout_p)   flattened, lane-dense output row-tile (f32)
    t = pl.program_id(1)
    c_in = x_ref.shape[-1]
    c_out_p = o_ref.shape[-1]
    m = tile_oh * ow
    row0 = t * (tile_oh * stride)          # first padded-input row of this tile

    acc = jnp.zeros((m, c_out_p), dtype=jnp.float32)
    for ki in range(k):                    # static unroll -> k*k small MXU dots
        for kj in range(k):
            if stride == 1:
                patch = x_ref[pl.ds(row0 + ki, tile_oh), pl.ds(kj, ow), :]
            else:
                # TODO(synk): stride > 1 path is functional but untuned.
                span_h = (tile_oh - 1) * stride + 1
                span_w = (ow - 1) * stride + 1
                patch = x_ref[pl.ds(row0 + ki, span_h), pl.ds(kj, span_w), :]
                patch = patch[::stride, ::stride, :]
            patch = patch.reshape(m, c_in).astype(mxu_dtype)
            acc = acc + jnp.dot(patch, w_ref[ki, kj],
                                preferred_element_type=jnp.float32)

    y = _apply_act(acc + b_ref[...], act)  # BN scale already folded into weight
    o_ref[...] = y.astype(o_ref.dtype)


# --------------------------------- wrapper ------------------------------------
def _pick_tile_oh(oh, ow, max_rows):
    best = oh                              # single tile is always layout-legal
    for cand in range(1, oh + 1):
        if oh % cand:
            continue
        if cand * ow > max_rows:
            continue
        if cand != oh and (cand * ow) % 8 != 0:
            continue                       # keep flattened row-tile sublane-aligned
        best = cand
    return best


def conv_norm_layer(x_nchw, weight, gamma, beta, running_mean, running_var,
                    *, stride=1, padding=None, eps=1e-5, act=None,
                    conv_bias=None, mxu_dtype=jnp.bfloat16,
                    max_rows_per_tile=1024):
    """ConvNormLayer forward. x_nchw: (N, Cin, H, W), weight: (Cout, Cin, k, k)."""
    c_out, c_in, k, k2 = weight.shape
    assert k == k2, "only square kernels supported"
    pad = (k - 1) // 2 if padding is None else padding
    N, _, H, W = x_nchw.shape
    OH = (H + 2 * pad - k) // stride + 1
    OW = (W + 2 * pad - k) // stride + 1
    Hp, Wp = H + 2 * pad, W + 2 * pad

    # ---- glue (one pass each): layout, spatial pad, BN folding ----
    x_nhwc = jnp.transpose(x_nchw, (0, 2, 3, 1)).astype(jnp.float32)
    x_p = jnp.pad(x_nhwc, ((0, 0), (pad, pad), (pad, pad), (0, 0)))

    scale = gamma / jnp.sqrt(running_var + eps)               # (Cout,)
    bias = beta - running_mean * scale                        # (Cout,)
    if conv_bias is not None:
        bias = bias + conv_bias * scale
    w_folded = jnp.transpose(weight, (2, 3, 1, 0)) * scale    # (k, k, Cin, Cout)

    # lane-dense output: pad Cout up to a multiple of 128, slice off afterwards.
    c_out_p = ((c_out + 127) // 128) * 128
    if c_out_p != c_out:
        w_folded = jnp.pad(w_folded, ((0, 0), (0, 0), (0, 0), (0, c_out_p - c_out)))
        bias = jnp.pad(bias, ((0, c_out_p - c_out),))
    w_folded = w_folded.astype(mxu_dtype)
    bias2d = bias.reshape(1, c_out_p).astype(jnp.float32)

    tile_oh = _pick_tile_oh(OH, OW, max_rows_per_tile)
    n_t = OH // tile_oh
    m = tile_oh * OW

    kernel = functools.partial(_conv_bn_act_kernel, k=k, stride=stride,
                               tile_oh=tile_oh, ow=OW, act=act,
                               mxu_dtype=mxu_dtype)

    # VMEM budget: image + weight resident, output double-buffered, plus slack for
    # in-kernel temporaries.  Keep the scoped limit under v7x's 64 MiB physical VMEM.
    est = (2 * Hp * Wp * c_in * 4
           + k * k * c_in * c_out_p * jnp.dtype(mxu_dtype).itemsize
           + c_out_p * 4
           + 2 * m * c_out_p * 4
           + 4 * m * c_in * 4 + 2 * m * c_out_p * 4)
    vmem_limit = int(min(max(2 * est, 32 * 1024 * 1024), 56 * 1024 * 1024))

    out = pl.pallas_call(
        kernel,
        out_shape=jax.ShapeDtypeStruct((N, OH * OW, c_out_p), jnp.float32),
        grid_spec=pltpu.PrefetchScalarGridSpec(
            num_scalar_prefetch=0,
            grid=(N, n_t),
            in_specs=[
                # whole padded image of batch n (re-DMA'd only when n changes)
                pl.BlockSpec((None, Hp, Wp, c_in), lambda n, t: (n, 0, 0, 0)),
                # resident, BN-folded weight and bias
                pl.BlockSpec((k, k, c_in, c_out_p), lambda n, t: (0, 0, 0, 0)),
                pl.BlockSpec((1, c_out_p), lambda n, t: (0, 0)),
            ],
            out_specs=pl.BlockSpec((None, m, c_out_p), lambda n, t: (n, t, 0)),
        ),
        compiler_params=pltpu.CompilerParams(
            dimension_semantics=("parallel", "parallel"),
            vmem_limit_bytes=vmem_limit),
    )(x_p, w_folded, bias2d)

    out = out[..., :c_out].reshape(N, OH, OW, c_out)   # drop pad channels, un-flatten
    return jnp.transpose(out, (0, 3, 1, 2))            # NHWC -> NCHW (PyTorch parity)


# -------------------------------- references ----------------------------------
def _reference_f32(x, weight, gamma, beta, mean, var, *, stride, padding, eps, act):
    c_out, _, k, _ = weight.shape
    pad = (k - 1) // 2 if padding is None else padding
    y = lax.conv_general_dilated(
        x, weight, window_strides=(stride, stride),
        padding=((pad, pad), (pad, pad)),
        dimension_numbers=("NCHW", "OIHW", "NCHW"))
    scale = (gamma / jnp.sqrt(var + eps)).reshape(1, c_out, 1, 1)
    bias = (beta - mean * gamma / jnp.sqrt(var + eps)).reshape(1, c_out, 1, 1)
    return _apply_act(y * scale + bias, act)


def _reference_bf16_matched(x, weight, gamma, beta, mean, var,
                            *, stride, padding, eps, act):
    # Same bf16 quantization of inputs / folded weights as the kernel, f32 accum.
    c_out, _, k, _ = weight.shape
    pad = (k - 1) // 2 if padding is None else padding
    scale = gamma / jnp.sqrt(var + eps)
    bias = (beta - mean * scale).reshape(1, c_out, 1, 1)
    w_folded = (weight * scale.reshape(c_out, 1, 1, 1)).astype(jnp.bfloat16)
    y = lax.conv_general_dilated(
        x.astype(jnp.bfloat16), w_folded, window_strides=(stride, stride),
        padding=((pad, pad), (pad, pad)),
        dimension_numbers=("NCHW", "OIHW", "NCHW"),
        preferred_element_type=jnp.float32)
    return _apply_act(y + bias, act)


# ----------------------------------- main --------------------------------------
if __name__ == "__main__":
    key = jax.random.PRNGKey(0)
    kx, kw, kg, kb, km, kv = jax.random.split(key, 6)

    # ConvNormLayer(ch_in=4, ch_out=8, kernel_size=3, stride=1, act='silu')
    N, C_in, H, W = 2, 4, 16, 16
    C_out, k, stride = 8, 3, 1
    act = "silu"
    eps = 1e-5

    x = jax.random.normal(kx, (N, C_in, H, W), dtype=jnp.float32)
    weight = jax.random.normal(kw, (C_out, C_in, k, k), dtype=jnp.float32) * 0.1
    gamma = jax.random.uniform(kg, (C_out,), minval=0.5, maxval=1.5, dtype=jnp.float32)
    beta = jax.random.normal(kb, (C_out,), dtype=jnp.float32) * 0.1
    running_mean = jax.random.normal(km, (C_out,), dtype=jnp.float32) * 0.1
    running_var = jax.random.uniform(kv, (C_out,), minval=0.5, maxval=1.5, dtype=jnp.float32)

    # max_rows_per_tile=128 forces >1 output-row tile so the row-tiling path is exercised.
    y = conv_norm_layer(x, weight, gamma, beta, running_mean, running_var,
                        stride=stride, padding=None, eps=eps, act=act,
                        max_rows_per_tile=128)
    y = jax.block_until_ready(y)
    assert y.shape == (N, C_out, H, W), y.shape

    # (1) tight check vs. a reference using the same bf16-quantized folded weights
    #     and bf16 activations with f32 accumulation (isolates structural bugs).
    y_tight = _reference_bf16_matched(x, weight, gamma, beta, running_mean, running_var,
                                      stride=stride, padding=None, eps=eps, act=act)
    err_tight = float(jnp.max(jnp.abs(y - y_tight)))
    assert jnp.allclose(y, y_tight, atol=2e-3, rtol=2e-3), err_tight

    # (2) loose check vs. the PyTorch-faithful f32 reference (bf16 MXU inputs).
    y_f32 = _reference_f32(x, weight, gamma, beta, running_mean, running_var,
                           stride=stride, padding=None, eps=eps, act=act)
    err_f32 = float(jnp.max(jnp.abs(y - y_f32)))
    assert jnp.allclose(y, y_f32, atol=6e-2, rtol=6e-2), err_f32

    print("KERNEL_OK")
</pallas_src>

<mosaic_0001>
module attributes {stable_mosaic.version = 11 : i64} {
  func.func @_conv_bn_act_kernel(%arg0: i32, %arg1: i32, %arg2: memref<1x18x18x4xf32, #tpu.memory_space<vmem>>, %arg3: memref<3x3x4x128xbf16, #tpu.memory_space<vmem>>, %arg4: memref<1x128xf32, #tpu.memory_space<vmem>>, %arg5: memref<1x128x128xf32, #tpu.memory_space<vmem>>) attributes {dimension_semantics = [#tpu.dimension_semantics<parallel>, #tpu.dimension_semantics<parallel>], iteration_bounds = array<i64: 2, 2>, scalar_prefetch = 0 : i64, scratch_operands = 0 : i64, tpu.core_type = #tpu.core_type<tc>, window_params = [{transform_indices = @transform_0, window_bounds = array<i64: 1, 18, 18, 4>}, {pipeline_mode = #tpu.pipeline_mode<synchronous>, transform_indices = @transform_1, window_bounds = array<i64: 3, 3, 4, 128>}, {pipeline_mode = #tpu.pipeline_mode<synchronous>, transform_indices = @transform_2, window_bounds = array<i64: 1, 128>}, {transform_indices = @transform_3, window_bounds = array<i64: 1, 128, 128>}]} {
    %c8_i32 = arith.constant 8 : i32
    %0 = arith.muli %arg1, %c8_i32 : i32
    %cst = arith.constant 0.000000e+00 : f32
    %1 = vector.broadcast %cst : f32 to vector<128x128xf32>
    %c0_i32 = arith.constant 0 : i32
    %2 = arith.addi %0, %c0_i32 : i32
    %c0 = arith.constant 0 : index
    %3 = arith.index_cast %2 : i32 to index
    %c0_0 = arith.constant 0 : index
    %c0_1 = arith.constant 0 : index
    %4 = vector.load %arg2[%c0, %3, %c0_0, %c0_1] : memref<1x18x18x4xf32, #tpu.memory_space<vmem>>, vector<1x8x16x4xf32>
    %5 = vector.shape_cast %4 : vector<1x8x16x4xf32> to vector<8x16x4xf32>
    %6 = vector.shape_cast %5 : vector<8x16x4xf32> to vector<128x4xf32>
    %7 = arith.truncf %6 : vector<128x4xf32> to vector<128x4xbf16>
    %c0_2 = arith.constant 0 : index
    %c0_3 = arith.constant 0 : index
    %c0_4 = arith.constant 0 : index
    %c0_5 = arith.constant 0 : index
    %8 = vector.load %arg3[%c0_2, %c0_3, %c0_4, %c0_5] : memref<3x3x4x128xbf16, #tpu.memory_space<vmem>>, vector<1x1x4x128xbf16>
    %9 = vector.shape_cast %8 : vector<1x1x4x128xbf16> to vector<4x128xbf16>
    %cst_6 = arith.constant dense<0.000000e+00> : vector<128x128xf32>
    %10 = tpu.matmul %7, %9, %cst_6 {dimension_numbers = #tpu.dot_dimension_numbers<[1], [0], [0], [1], [0, 0, 1, 1], [], []>} : vector<128x4xbf16>, vector<4x128xbf16>, vector<128x128xf32> -> vector<128x128xf32>
    %11 = arith.addf %1, %10 : vector<128x128xf32>
    %c0_i32_7 = arith.constant 0 : i32
    %12 = arith.addi %0, %c0_i32_7 : i32
    %c0_8 = arith.constant 0 : index
    %13 = arith.index_cast %12 : i32 to index
    %c1 = arith.constant 1 : index
    %c0_9 = arith.constant 0 : index
    %14 = vector.load %arg2[%c0_8, %13, %c1, %c0_9] : memref<1x18x18x4xf32, #tpu.memory_space<vmem>>, vector<1x8x16x4xf32>
    %15 = vector.shape_cast %14 : vector<1x8x16x4xf32> to vector<8x16x4xf32>
    %16 = vector.shape_cast %15 : vector<8x16x4xf32> to vector<128x4xf32>
    %17 = arith.truncf %16 : vector<128x4xf32> to vector<128x4xbf16>
    %c0_10 = arith.constant 0 : index
    %c1_11 = arith.constant 1 : index
    %c0_12 = arith.constant 0 : index
    %c0_13 = arith.constant 0 : index
    %18 = vector.load %arg3[%c0_10, %c1_11, %c0_12, %c0_13] : memref<3x3x4x128xbf16, #tpu.memory_space<vmem>>, vector<1x1x4x128xbf16>
    %19 = vector.shape_cast %18 : vector<1x1x4x128xbf16> to vector<4x128xbf16>
    %cst_14 = arith.constant dense<0.000000e+00> : vector<128x128xf32>
    %20 = tpu.matmul %17, %19, %cst_14 {dimension_numbers = #tpu.dot_dimension_numbers<[1], [0], [0], [1], [0, 0, 1, 1], [], []>} : vector<128x4xbf16>, vector<4x128xbf16>, vector<128x128xf32> -> vector<128x128xf32>
    %21 = arith.addf %11, %20 : vector<128x128xf32>
    %c0_i32_15 = arith.constant 0 : i32
    %22 = arith.addi %0, %c0_i32_15 : i32
    %c0_16 = arith.constant 0 : index
    %23 = arith.index_cast %22 : i32 to index
    %c2 = arith.constant 2 : index
    %c0_17 = arith.constant 0 : index
    %24 = vector.load %arg2[%c0_16, %23, %c2, %c0_17] : memref<1x18x18x4xf32, #tpu.memory_space<vmem>>, vector<1x8x16x4xf32>
    %25 = vector.shape_cast %24 : vector<1x8x16x4xf32> to vector<8x16x4xf32>
    %26 = vector.shape_cast %25 : vector<8x16x4xf32> to vector<128x4xf32>
    %27 = arith.truncf %26 : vector<128x4xf32> to vector<128x4xbf16>
    %c0_18 = arith.constant 0 : index
    %c2_19 = arith.constant 2 : index
    %c0_20 = arith.constant 0 : index
    %c0_21 = arith.constant 0 : index
    %28 = vector.load %arg3[%c0_18, %c2_19, %c0_20, %c0_21] : memref<3x3x4x128xbf16, #tpu.memory_space<vmem>>, vector<1x1x4x128xbf16>
    %29 = vector.shape_cast %28 : vector<1x1x4x128xbf16> to vector<4x128xbf16>
    %cst_22 = arith.constant dense<0.000000e+00> : vector<128x128xf32>
    %30 = tpu.matmul %27, %29, %cst_22 {dimension_numbers = #tpu.dot_dimension_numbers<[1], [0], [0], [1], [0, 0, 1, 1], [], []>} : vector<128x4xbf16>, vector<4x128xbf16>, vector<128x128xf32> -> vector<128x128xf32>
    %31 = arith.addf %21, %30 : vector<128x128xf32>
    %c1_i32 = arith.constant 1 : i32
    %32 = arith.addi %0, %c1_i32 : i32
    %c0_23 = arith.constant 0 : index
    %33 = arith.index_cast %32 : i32 to index
    %c0_24 = arith.constant 0 : index
    %c0_25 = arith.constant 0 : index
    %34 = vector.load %arg2[%c0_23, %33, %c0_24, %c0_25] : memref<1x18x18x4xf32, #tpu.memory_space<vmem>>, vector<1x8x16x4xf32>
    %35 = vector.shape_cast %34 : vector<1x8x16x4xf32> to vector<8x16x4xf32>
    %36 = vector.shape_cast %35 : vector<8x16x4xf32> to vector<128x4xf32>
    %37 = arith.truncf %36 : vector<128x4xf32> to vector<128x4xbf16>
    %c1_26 = arith.constant 1 : index
    %c0_27 = arith.constant 0 : index
    %c0_28 = arith.constant 0 : index
    %c0_29 = arith.constant 0 : index
    %38 = vector.load %arg3[%c1_26, %c0_27, %c0_28, %c0_29] : memref<3x3x4x128xbf16, #tpu.memory_space<vmem>>, vector<1x1x4x128xbf16>
    %39 = vector.shape_cast %38 : vector<1x1x4x128xbf16> to vector<4x128xbf16>
    %cst_30 = arith.constant dense<0.000000e+00> : vector<128x128xf32>
    %40 = tpu.matmul %37, %39, %cst_30 {dimension_numbers = #tpu.dot_dimension_numbers<[1], [0], [0], [1], [0, 0, 1, 1], [], []>} : vector<128x4xbf16>, vector<4x128xbf16>, vector<128x128xf32> -> vector<128x128xf32>
    %41 = arith.addf %31, %40 : vector<128x128xf32>
    %c1_i32_31 = arith.constant 1 : i32
    %42 = arith.addi %0, %c1_i32_31 : i32
    %c0_32 = arith.constant 0 : index
    %43 = arith.index_cast %42 : i32 to index
    %c1_33 = arith.constant 1 : index
    %c0_34 = arith.constant 0 : index
    %44 = vector.load %arg2[%c0_32, %43, %c1_33, %c0_34] : memref<1x18x18x4xf32, #tpu.memory_space<vmem>>, vector<1x8x16x4xf32>
    %45 = vector.shape_cast %44 : vector<1x8x16x4xf32> to vector<8x16x4xf32>
    %46 = vector.shape_cast %45 : vector<8x16x4xf32> to vector<128x4xf32>
    %47 = arith.truncf %46 : vector<128x4xf32> to vector<128x4xbf16>
    %c1_35 = arith.constant 1 : index
    %c1_36 = arith.constant 1 : index
    %c0_37 = arith.constant 0 : index
    %c0_38 = arith.constant 0 : index
    %48 = vector.load %arg3[%c1_35, %c1_36, %c0_37, %c0_38] : memref<3x3x4x128xbf16, #tpu.memory_space<vmem>>, vector<1x1x4x128xbf16>
    %49 = vector.shape_cast %48 : vector<1x1x4x128xbf16> to vector<4x128xbf16>
    %cst_39 = arith.constant dense<0.000000e+00> : vector<128x128xf32>
    %50 = tpu.matmul %47, %49, %cst_39 {dimension_numbers = #tpu.dot_dimension_numbers<[1], [0], [0], [1], [0, 0, 1, 1], [], []>} : vector<128x4xbf16>, vector<4x128xbf16>, vector<128x128xf32> -> vector<128x128xf32>
    %51 = arith.addf %41, %50 : vector<128x128xf32>
    %c1_i32_40 = arith.constant 1 : i32
    %52 = arith.addi %0, %c1_i32_40 : i32
    %c0_41 = arith.constant 0 : index
    %53 = arith.index_cast %52 : i32 to index
    %c2_42 = arith.constant 2 : index
    %c0_43 = arith.constant 0 : index
    %54 = vector.load %arg2[%c0_41, %53, %c2_42, %c0_43] : memref<1x18x18x4xf32, #tpu.memory_space<vmem>>, vector<1x8x16x4xf32>
    %55 = vector.shape_cast %54 : vector<1x8x16x4xf32> to vector<8x16x4xf32>
    %56 = vector.shape_cast %55 : vector<8x16x4xf32> to vector<128x4xf32>
    %57 = arith.truncf %56 : vector<128x4xf32> to vector<128x4xbf16>
    %c1_44 = arith.constant 1 : index
    %c2_45 = arith.constant 2 : index
    %c0_46 = arith.constant 0 : index
    %c0_47 = arith.constant 0 : index
    %58 = vector.load %arg3[%c1_44, %c2_45, %c0_46, %c0_47] : memref<3x3x4x128xbf16, #tpu.memory_space<vmem>>, vector<1x1x4x128xbf16>
    %59 = vector.shape_cast %58 : vector<1x1x4x128xbf16> to vector<4x128xbf16>
    %cst_48 = arith.constant dense<0.000000e+00> : vector<128x128xf32>
    %60 = tpu.matmul %57, %59, %cst_48 {dimension_numbers = #tpu.dot_dimension_numbers<[1], [0], [0], [1], [0, 0, 1, 1], [], []>} : vector<128x4xbf16>, vector<4x128xbf16>, vector<128x128xf32> -> vector<128x128xf32>
    %61 = arith.addf %51, %60 : vector<128x128xf32>
    %c2_i32 = arith.constant 2 : i32
    %62 = arith.addi %0, %c2_i32 : i32
    %c0_49 = arith.constant 0 : index
    %63 = arith.index_cast %62 : i32 to index
    %c0_50 = arith.constant 0 : index
    %c0_51 = arith.constant 0 : index
    %64 = vector.load %arg2[%c0_49, %63, %c0_50, %c0_51] : memref<1x18x18x4xf32, #tpu.memory_space<vmem>>, vector<1x8x16x4xf32>
    %65 = vector.shape_cast %64 : vector<1x8x16x4xf32> to vector<8x16x4xf32>
    %66 = vector.shape_cast %65 : vector<8x16x4xf32> to vector<128x4xf32>
    %67 = arith.truncf %66 : vector<128x4xf32> to vector<128x4xbf16>
    %c2_52 = arith.constant 2 : index
    %c0_53 = arith.constant 0 : index
    %c0_54 = arith.constant 0 : index
    %c0_55 = arith.constant 0 : index
    %68 = vector.load %arg3[%c2_52, %c0_53, %c0_54, %c0_55] : memref<3x3x4x128xbf16, #tpu.memory_space<vmem>>, vector<1x1x4x128xbf16>
    %69 = vector.shape_cast %68 : vector<1x1x4x128xbf16> to vector<4x128xbf16>
    %cst_56 = arith.constant dense<0.000000e+00> : vector<128x128xf32>
    %70 = tpu.matmul %67, %69, %cst_56 {dimension_numbers = #tpu.dot_dimension_numbers<[1], [0], [0], [1], [0, 0, 1, 1], [], []>} : vector<128x4xbf16>, vector<4x128xbf16>, vector<128x128xf32> -> vector<128x128xf32>
    %71 = arith.addf %61, %70 : vector<128x128xf32>
    %c2_i32_57 = arith.constant 2 : i32
    %72 = arith.addi %0, %c2_i32_57 : i32
    %c0_58 = arith.constant 0 : index
    %73 = arith.index_cast %72 : i32 to index
    %c1_59 = arith.constant 1 : index
    %c0_60 = arith.constant 0 : index
    %74 = vector.load %arg2[%c0_58, %73, %c1_59, %c0_60] : memref<1x18x18x4xf32, #tpu.memory_space<vmem>>, vector<1x8x16x4xf32>
    %75 = vector.shape_cast %74 : vector<1x8x16x4xf32> to vector<8x16x4xf32>
    %76 = vector.shape_cast %75 : vector<8x16x4xf32> to vector<128x4xf32>
    %77 = arith.truncf %76 : vector<128x4xf32> to vector<128x4xbf16>
    %c2_61 = arith.constant 2 : index
    %c1_62 = arith.constant 1 : index
    %c0_63 = arith.constant 0 : index
    %c0_64 = arith.constant 0 : index
    %78 = vector.load %arg3[%c2_61, %c1_62, %c0_63, %c0_64] : memref<3x3x4x128xbf16, #tpu.memory_space<vmem>>, vector<1x1x4x128xbf16>
    %79 = vector.shape_cast %78 : vector<1x1x4x128xbf16> to vector<4x128xbf16>
    %cst_65 = arith.constant dense<0.000000e+00> : vector<128x128xf32>
    %80 = tpu.matmul %77, %79, %cst_65 {dimension_numbers = #tpu.dot_dimension_numbers<[1], [0], [0], [1], [0, 0, 1, 1], [], []>} : vector<128x4xbf16>, vector<4x128xbf16>, vector<128x128xf32> -> vector<128x128xf32>
    %81 = arith.addf %71, %80 : vector<128x128xf32>
    %c2_i32_66 = arith.constant 2 : i32
    %82 = arith.addi %0, %c2_i32_66 : i32
    %c0_67 = arith.constant 0 : index
    %83 = arith.index_cast %82 : i32 to index
    %c2_68 = arith.constant 2 : index
    %c0_69 = arith.constant 0 : index
    %84 = vector.load %arg2[%c0_67, %83, %c2_68, %c0_69] : memref<1x18x18x4xf32, #tpu.memory_space<vmem>>, vector<1x8x16x4xf32>
    %85 = vector.shape_cast %84 : vector<1x8x16x4xf32> to vector<8x16x4xf32>
    %86 = vector.shape_cast %85 : vector<8x16x4xf32> to vector<128x4xf32>
    %87 = arith.truncf %86 : vector<128x4xf32> to vector<128x4xbf16>
    %c2_70 = arith.constant 2 : index
    %c2_71 = arith.constant 2 : index
    %c0_72 = arith.constant 0 : index
    %c0_73 = arith.constant 0 : index
    %88 = vector.load %arg3[%c2_70, %c2_71, %c0_72, %c0_73] : memref<3x3x4x128xbf16, #tpu.memory_space<vmem>>, vector<1x1x4x128xbf16>
    %89 = vector.shape_cast %88 : vector<1x1x4x128xbf16> to vector<4x128xbf16>
    %cst_74 = arith.constant dense<0.000000e+00> : vector<128x128xf32>
    %90 = tpu.matmul %87, %89, %cst_74 {dimension_numbers = #tpu.dot_dimension_numbers<[1], [0], [0], [1], [0, 0, 1, 1], [], []>} : vector<128x4xbf16>, vector<4x128xbf16>, vector<128x128xf32> -> vector<128x128xf32>
    %91 = arith.addf %81, %90 : vector<128x128xf32>
    %c0_75 = arith.constant 0 : index
    %c0_76 = arith.constant 0 : index
    %92 = vector.load %arg4[%c0_75, %c0_76] : memref<1x128xf32, #tpu.memory_space<vmem>>, vector<1x128xf32>
    %93 = vector.broadcast %92 : vector<1x128xf32> to vector<128x128xf32>
    %94 = arith.addf %91, %93 : vector<128x128xf32>
    %95 = arith.negf %94 : vector<128x128xf32>
    %96 = math.exp %95 : vector<128x128xf32>
    %cst_77 = arith.constant 1.000000e+00 : f32
    %97 = vector.broadcast %cst_77 : f32 to vector<128x128xf32>
    %98 = arith.addf %97, %96 : vector<128x128xf32>
    %99 = arith.divf %97, %98 : vector<128x128xf32>
    %100 = arith.mulf %94, %99 : vector<128x128xf32>
    %c0_78 = arith.constant 0 : index
    %c0_79 = arith.constant 0 : index
    %c0_80 = arith.constant 0 : index
    %101 = vector.load %arg5[%c0_78, %c0_79, %c0_80] : memref<1x128x128xf32, #tpu.memory_space<vmem>>, vector<1x128x128xf32>
    %102 = vector.shape_cast %101 : vector<1x128x128xf32> to vector<128x128xf32>
    %103 = vector.shape_cast %100 : vector<128x128xf32> to vector<1x128x128xf32>
    tpu.vector_store %arg5[%c0_78, %c0_79, %c0_80], %103 {strides = array<i32>} : memref<1x128x128xf32, #tpu.memory_space<vmem>>, vector<1x128x128xf32>,
    return
  }
  func.func @transform_0(%arg0: i32, %arg1: i32) -> (i32, i32, i32, i32) {
    %c0_i32 = arith.constant 0 : i32
    %c0_i32_0 = arith.constant 0 : i32
    %c0_i32_1 = arith.constant 0 : i32
    %c0_i32_2 = arith.constant 0 : i32
    return %arg0, %c0_i32, %c0_i32_0, %c0_i32_1 : i32, i32, i32, i32
  }
  func.func @transform_1(%arg0: i32, %arg1: i32) -> (i32, i32, i32, i32) {
    %c0_i32 = arith.constant 0 : i32
    %c0_i32_0 = arith.constant 0 : i32
    %c0_i32_1 = arith.constant 0 : i32
    %c0_i32_2 = arith.constant 0 : i32
    %c0_i32_3 = arith.constant 0 : i32
    return %c0_i32, %c0_i32_0, %c0_i32_1, %c0_i32_2 : i32, i32, i32, i32
  }
  func.func @transform_2(%arg0: i32, %arg1: i32) -> (i32, i32) {
    %c0_i32 = arith.constant 0 : i32
    %c0_i32_0 = arith.constant 0 : i32
    %c0_i32_1 = arith.constant 0 : i32
    return %c0_i32, %c0_i32_0 : i32, i32
  }
  func.func @transform_3(%arg0: i32, %arg1: i32) -> (i32, i32, i32) {
    %c0_i32 = arith.constant 0 : i32
    %c0_i32_0 = arith.constant 0 : i32
    return %arg0, %arg1, %c0_i32 : i32, i32, i32
  }
}

</mosaic_0001>

<llo_original>
// kernel: tpu_custom_call.1
$region0: #{tpu_custom_call.1}
  #allocation0 [shape = 'u32[]', space=smem, size = 0x4, offset = 0x4, fixed_abs, tag = 'smem constant byte address 0x4 - core index']
  #allocation1 [shape = 'u32[144,128]{1,0:T(1,128)}', space=vmem, size = 0x12000, scoped, tag = 'internal scratch']
  %s0 = inlined_call_operand.vmem [shape: f32[2,18,18,4], index: 0, kind: input, shape index: {}]
  %s1 = inlined_call_operand.vmem [shape: bf16[3,3,4,128], index: 1, kind: input, shape index: {}]
  %s2 = inlined_call_operand.vmem [shape: f32[1,128], index: 2, kind: input, shape index: {}]
  %s3 = inlined_call_operand.hbm [shape: f32[2,256,128], index: 3, kind: output, shape index: {}]
  %s4 = sld [smem:[#allocation0]]
  $region45: #{tpu_custom_call.1} parent=0
    _
  %s6 = ssub.s32 1, %s4
  %s7 = scalar_select 0, %s6, %s4
  $region1: #{tpu_custom_call.1} parent=0
    #allocation2 [shape = 'u8[131072]{0}', space=vmem, size = 0x20000, scoped, tag = 'output window, operand 0']
    #allocation3 [shape = 's32[2]{0}', space=sflag, size = 0x8, scoped, tag = 'scoped memory for tpu_custom_call.1']
    %8 = vsyncpa [#allocation3], 0
    %s9 = scalar_lea.sflag [#allocation3], 1
    %10 = vsyncpa %s9, 0
    loop: start=0, step=1, limit=6
    $region2: #{tpu_custom_call.1} parent=1 // loop_pre_header
      _
    $region3: #{tpu_custom_call.1} parent=1 // loop_header
      %s12 = sphi 0, %s16
      %p13 = scmp.ge.s32.totalorder %s12, 6
      %s19 = sphi 0, %s31
      %s20 = sphi 0, %s27
      %s21 = sphi 0, %s19
      %s22 = sphi 0, %s20
      %s23 = sphi 0, %s21
      %s24 = sphi 0, %s22
      %s34 = sphi 0, %s36
      %s37 = sphi 0, %s34
      %s38 = sphi 0, %s37
      %s54 = sphi 0, %s38
      %s58 = sphi 0, %s58
      %s60 = sphi 0, %s58
      %s61 = sphi 0, %s60
      %s75 = sphi 0, %s61
      %s79 = sphi 0, %s79
      %s81 = sphi 0, %s79
      %s82 = sphi 0, %s81
      %s96 = sphi 0, %s82
      %s104 = sphi 0, %s106
      %s107 = sphi 0, %s104
      %s108 = sphi 0, %s107
      %s124 = sphi 0, %s108
    $region4: #{tpu_custom_call.1} parent=1 // loop_header_branch
      %15 = sbr.rel (%p13) target = $region8
    $region5: #{tpu_custom_call.1} parent=1 // loop_body
      %s17 = ssub.s32 %s12, 1
      %s18 = ssub.s32 %s12, 2
      %s25 = sadd.s32 1, %s20
      %p26 = scmp.ge.s32.totalorder %s25, 2
      %s27 = scalar_select %p26, 0, %s25
      %s28 = sadd.s32 1, %s19
      %s29 = scalar_select %p26, %s28, %s19
      %p30 = scmp.ge.s32.totalorder %s29, 2
      %s31 = scalar_select %p30, 0, %s29
      %s32 = ssub.s32 %s19, %s31
      %p33 = scmp.eq.s32.totalorder %s32, 0
      %s35 = sadd.s32 %s34, 1
      %s36 = scalar_select %p33, %s34, %s35
      %p39 = pneg %p33
      %p40 = scmp.eq.s32.totalorder %s12, 3
      %p41 = por %p39, %p40
      %p42 = scmp.ne.s32.totalorder %s34, %s37
      %p43 = scmp.eq.s32.totalorder %s12, 0
      %p44 = por %p42, %p43
      %p45 = scmp.ne.s32.totalorder %s34, %s37
      %p46 = scmp.eq.s32.totalorder %s17, 3
      %p47 = por %p45, %p46
      %p48 = scmp.ne.s32.totalorder %s37, %s38
      %p49 = scmp.eq.s32.totalorder %s17, 0
      %p50 = por %p48, %p49
      %p51 = scmp.ne.s32.totalorder %s37, %s38
      %p52 = scmp.eq.s32.totalorder %s18, 3
      %p53 = por %p51, %p52
      %p55 = scmp.ne.s32.totalorder %s38, %s54
      %p56 = scmp.eq.s32.totalorder %s18, 0
      %p57 = por %p55, %p56
      %s59 = sadd.s32 %s58, 1
      %p62 = scmp.eq.s32.totalorder %s12, 3
      %p63 = scmp.ne.s32.totalorder %s58, %s60
      %p64 = scmp.eq.s32.totalorder %s12, 0
      %p65 = por %p63, %p64
      %p66 = scmp.ne.s32.totalorder %s58, %s60
      %p67 = scmp.eq.s32.totalorder %s17, 3
      %p68 = por %p66, %p67
      %p69 = scmp.ne.s32.totalorder %s60, %s61
      %p70 = scmp.eq.s32.totalorder %s17, 0
      %p71 = por %p69, %p70
      %p72 = scmp.ne.s32.totalorder %s60, %s61
      %p73 = scmp.eq.s32.totalorder %s18, 3
      %p74 = por %p72, %p73
      %p76 = scmp.ne.s32.totalorder %s61, %s75
      %p77 = scmp.eq.s32.totalorder %s18, 0
      %p78 = por %p76, %p77
      %s80 = sadd.s32 %s79, 1
      %p83 = scmp.eq.s32.totalorder %s12, 3
      %p84 = scmp.ne.s32.totalorder %s79, %s81
      %p85 = scmp.eq.s32.totalorder %s12, 0
      %p86 = por %p84, %p85
      %p87 = scmp.ne.s32.totalorder %s79, %s81
      %p88 = scmp.eq.s32.totalorder %s17, 3
      %p89 = por %p87, %p88
      %p90 = scmp.ne.s32.totalorder %s81, %s82
      %p91 = scmp.eq.s32.totalorder %s17, 0
      %p92 = por %p90, %p91
      %p93 = scmp.ne.s32.totalorder %s81, %s82
      %p94 = scmp.eq.s32.totalorder %s18, 3
      %p95 = por %p93, %p94
      %p97 = scmp.ne.s32.totalorder %s82, %s96
      %p98 = scmp.eq.s32.totalorder %s18, 0
      %p99 = por %p97, %p98
      %s100 = ssub.s32 %s19, %s31
      %s101 = ssub.s32 %s20, %s27
      %s102 = sor.u32 %s100, %s101
      %p103 = scmp.eq.s32.totalorder %s102, 0
      %s105 = sadd.s32 %s104, 1
      %s106 = scalar_select %p103, %s104, %s105
      %p109 = pneg %p103
      %p110 = scmp.eq.s32.totalorder %s12, 3
      %p111 = por %p109, %p110
      %p112 = scmp.ne.s32.totalorder %s104, %s107
      %p113 = scmp.eq.s32.totalorder %s12, 0
      %p114 = por %p112, %p113
      %p115 = scmp.ne.s32.totalorder %s104, %s107
      %p116 = scmp.eq.s32.totalorder %s17, 3
      %p117 = por %p115, %p116
      %p118 = scmp.ne.s32.totalorder %s107, %s108
      %p119 = scmp.eq.s32.totalorder %s17, 0
      %p120 = por %p118, %p119
      %p121 = scmp.ne.s32.totalorder %s107, %s108
      %p122 = scmp.eq.s32.totalorder %s18, 3
      %p123 = por %p121, %p122
      %p125 = scmp.ne.s32.totalorder %s108, %s124
      %p126 = scmp.eq.s32.totalorder %s18, 0
      %p127 = por %p125, %p126
      %p128 = scmp.le.s32.totalorder 1, %s12
      %p129 = scmp.lt.s32.totalorder %s12, 5
      %p130 = pnand %p128, %p129
      %p131 = pneg %p130
      // Predicated region
      $region9: #{tpu_custom_call.1} parent=5 // pred_check
        _
      $region10: #{tpu_custom_call.1} parent=5 // pred_check_branch
        %133 = sbr.rel (%p130) target = $region12
      $region11: #{tpu_custom_call.1} parent=5 // pred_region
        %s134 = ssub.s32 %s12, 1
        // Predicated region
        $region13: #{tpu_custom_call.1} parent=11 // pred_check
          %p135 = pneg %p71
        $region14: #{tpu_custom_call.1} parent=11 // pred_check_branch
          %137 = sbr.rel (%p135) target = $region16
        $region15: #{tpu_custom_call.1} parent=11 // pred_region
          _
        $region16: #{tpu_custom_call.1} parent=11 // pred_fallthru
          _
        // Predicated region
        $region17: #{tpu_custom_call.1} parent=11 // pred_check
          %p138 = pneg %p92
        $region18: #{tpu_custom_call.1} parent=11 // pred_check_branch
          %140 = sbr.rel (%p138) target = $region20
        $region19: #{tpu_custom_call.1} parent=11 // pred_region
          _
        $region20: #{tpu_custom_call.1} parent=11 // pred_fallthru
          _
      $region12: #{tpu_custom_call.1} parent=5 // pred_fallthru
        _
      %p141 = scmp.lt.s32.totalorder %s12, 4
      // Predicated region
      $region21: #{tpu_custom_call.1} parent=5 // pred_check
        %p142 = pneg %p141
      $region22: #{tpu_custom_call.1} parent=5 // pred_check_branch
        %144 = sbr.rel (%p142) target = $region24
      $region23: #{tpu_custom_call.1} parent=5 // pred_region
        // Predicated region
        $region25: #{tpu_custom_call.1} parent=23 // pred_check
          %p145 = pneg %p44
        $region26: #{tpu_custom_call.1} parent=23 // pred_check_branch
          %147 = sbr.rel (%p145) target = $region28
        $region27: #{tpu_custom_call.1} parent=23 // pred_region
          %p148 = scmp.lt.s32.totalorder %s19, 1
          %s149 = scalar_select %p148, %s19, 1
          %s150 = smul.addr %s149, 54
          %s151 = smul.addr %s150, 8
          %s152 = scalar_lea.vmem %s0, %s151
        $region28: #{tpu_custom_call.1} parent=23 // pred_fallthru
          _
      $region24: #{tpu_custom_call.1} parent=5 // pred_fallthru
        _
      %p153 = scmp.le.s32.totalorder 1, %s12
      %p154 = scmp.lt.s32.totalorder %s12, 5
      %p155 = pnand %p153, %p154
      %p156 = pneg %p155
      // Predicated region
      $region29: #{tpu_custom_call.1} parent=5 // pred_check
        _
      $region30: #{tpu_custom_call.1} parent=5 // pred_check_branch
        %158 = sbr.rel (%p155) target = $region32
      $region31: #{tpu_custom_call.1} parent=5 // pred_region
        %s159 = ssub.s32 %s12, 1
        %p160 = scmp.lt.s32.totalorder %s21, 1
        %s161 = scalar_select %p160, %s21, 1
        %s162 = smul.addr %s161, 54
        %s163 = smul.addr %s162, 8
        %s164 = scalar_lea.vmem %s0, %s163
        %p165 = pneg %p50
        %p166 = pneg %p47
        %p167 = pneg %p71
        %p168 = pneg %p68
        %p169 = pneg %p92
        %p170 = pneg %p89
        %p171 = pneg %p120
        %p172 = pneg %p117
        %s173 = sand.u32 %s107, 1
        %s174 = scalar_lea.sflag [#allocation3], %s173
        %s175 = sand.u32 %s107, 1
        %s176 = smul.addr %s175, 128
        %s177 = scalar_lea.vmem [#allocation2], %s176
        %p178 = scmp.lt.s32.totalorder %s21, 1
        %s179 = scalar_select %p178, %s21, 1
        %s180 = smul.addr %s179, 54
        %s181 = smul.addr %s180, 8
        %s182 = scalar_lea.vmem %s0, %s181
        %s183 = smul.u32 16, %s22
        %s185 = smul.u32 %s22, 8
        %s186 = smul.u32 %s185, 24
        %s187 = scalar_lea.vmem %s182, %s186
        %v188 = vld [vmem:[%s187] sm:$0xff]
        %v189 = vld [vmem:[%s187 + $0x8] sm:$0xff]
        %v190 = vld [vmem:[%s187 + $0x18] sm:$0xff]
        %v191 = vld [vmem:[%s187 + $0x20] sm:$0xff]
        %v192 = vld [vmem:[%s187 + $0x30] sm:$0xff]
        %v193 = vld [vmem:[%s187 + $0x38] sm:$0xff]
        %v194 = vld [vmem:[%s187 + $0x48] sm:$0xff]
        %v195 = vld [vmem:[%s187 + $0x50] sm:$0xff]
        %v196 = vld [vmem:[%s187 + $0x60] sm:$0xff]
        %v197 = vld [vmem:[%s187 + $0x68] sm:$0xff]
        %v198 = vld [vmem:[%s187 + $0x78] sm:$0xff]
        %v199 = vld [vmem:[%s187 + $0x80] sm:$0xff]
        %v200 = vld [vmem:[%s187 + $0x90] sm:$0xff]
        %v201 = vld [vmem:[%s187 + $0x98] sm:$0xff]
        %v202 = vld [vmem:[%s187 + $0xa8] sm:$0xff]
        %v203 = vld [vmem:[%s187 + $0xb0] sm:$0xff]
        %v204 = vpack.c.bf16 %v189, %v188
        %v205 = vpack.c.bf16 %v191, %v190
        %v206 = vpack.c.bf16 %v193, %v192
        %v207 = vpack.c.bf16 %v195, %v194
        %v208 = vpack.c.bf16 %v197, %v196
        %v209 = vpack.c.bf16 %v199, %v198
        %v210 = vpack.c.bf16 %v201, %v200
        %v211 = vpack.c.bf16 %v203, %v202
        %v212 = vld [vmem:[%s1] sm:$0x3]
        %v213 = vld [vmem:[%s187 + $0x1] sm:$0xff]
        %v214 = vld [vmem:[%s187 + $0x9] sm:$0xff]
        %v215 = vld [vmem:[%s187 + $0x19] sm:$0xff]
        %v216 = vld [vmem:[%s187 + $0x21] sm:$0xff]
        %v217 = vld [vmem:[%s187 + $0x31] sm:$0xff]
        %v218 = vld [vmem:[%s187 + $0x39] sm:$0xff]
        %v219 = vld [vmem:[%s187 + $0x49] sm:$0xff]
        %v220 = vld [vmem:[%s187 + $0x51] sm:$0xff]
        %v221 = vld [vmem:[%s187 + $0x61] sm:$0xff]
        %v222 = vld [vmem:[%s187 + $0x69] sm:$0xff]
        %v223 = vld [vmem:[%s187 + $0x79] sm:$0xff]
        %v224 = vld [vmem:[%s187 + $0x81] sm:$0xff]
        %v225 = vld [vmem:[%s187 + $0x91] sm:$0xff]
        %v226 = vld [vmem:[%s187 + $0x99] sm:$0xff]
        %v227 = vld [vmem:[%s187 + $0xa9] sm:$0xff]
        %v228 = vld [vmem:[%s187 + $0xb1] sm:$0xff]
        %v229 = vpack.c.bf16 %v214, %v213
        %v230 = vpack.c.bf16 %v216, %v215
        %v231 = vpack.c.bf16 %v218, %v217
        %v232 = vpack.c.bf16 %v220, %v219
        %v233 = vpack.c.bf16 %v222, %v221
        %v234 = vpack.c.bf16 %v224, %v223
        %v235 = vpack.c.bf16 %v226, %v225
        %v236 = vpack.c.bf16 %v228, %v227
        %s237 = scalar_lea.vmem %s1, 2
        %v238 = vld [vmem:[%s237] sm:$0x3]
        %vm239 = vcmask 31744
        %v241 = vsel %vm239, %v229, 0
        %v244 = vsel %vm239, %v230, 0
        %v247 = vsel %vm239, %v231, 0
        %v250 = vsel %vm239, %v232, 0
        %v253 = vsel %vm239, %v233, 0
        %v256 = vsel %vm239, %v234, 0
        %v259 = vsel %vm239, %v235, 0
        %v262 = vsel %vm239, %v236, 0
        %vm264 = vcmask 1041408
        %v266 = vsel %vm264, %v238, 0
        %268 = vmatprep.subr.bf16.mxu0 0
        %269 = vmatpush1.bf16.msra.mxu0 %v266
        %270 = vmatprep.subr.bf16.mxu0 0
        %271 = vmatpush1.bf16.msra.mxu0 0
        %272 = vmatprep.subr.bf16.mxu0 0
        %273 = vmatpush1.bf16.msra.mxu0 0
        %274 = vmatprep.subr.bf16.mxu0 0
        %275 = vmatpush1.bf16.msra.mxu0 0
        %276 = vmatprep.subr.bf16.mxu0 0
        %277 = vmatpush1.bf16.msra.mxu0 0
        %278 = vmatprep.subr.bf16.mxu0 0
        %279 = vmatpush1.bf16.msra.mxu0 0
        %280 = vmatprep.subr.bf16.mxu0 0
        %281 = vmatpush1.bf16.msra.mxu0 0
        %282 = vmatprep.subr.bf16.mxu0 0
        %283 = vmatpush1.bf16.msra.mxu0 0
        %284 = vmatprep.subr.bf16.mxu0 0
        %285 = vmatpush1.bf16.msra.mxu0 0
        %286 = vmatprep.subr.bf16.mxu0 0
        %287 = vmatpush1.bf16.msra.mxu0 0
        %288 = vmatprep.subr.bf16.mxu0 0
        %289 = vmatpush1.bf16.msra.mxu0 0
        %290 = vmatprep.subr.bf16.mxu0 0
        %291 = vmatpush1.bf16.msra.mxu0 0
        %292 = vmatprep.subr.bf16.mxu0 0
        %293 = vmatpush1.bf16.msra.mxu0 0
        %294 = vmatprep.subr.bf16.mxu0 0
        %295 = vmatpush1.bf16.msra.mxu0 0
        %296 = vmatprep.subr.bf16.mxu0 0
        %297 = vmatpush1.bf16.msra.mxu0 0
        %298 = vmatprep.subr.bf16.mxu0 0
        %299 = vmatpush1.bf16.msra.mxu0 0
        %300 = vmatprep.mubr.bf16.mxu0 0
        %301 = vmatmul.mubr.bf16.gmra.mrb[0].mxu0 %v241
        %v302 = vpop.f32.mrb[0].mxu0
        %v303 = vadd.f32 0.0, %v302
        %v304 = vpop.f32.mrb[0].mxu0
        %v305 = vpop.f32.mrb[0].mxu0
        %v306 = vadd.f32 0.0, %v305
        %v307 = vpop.f32.mrb[0].mxu0
        %308 = vmatprep.mubr.bf16.mxu0 0
        %309 = vmatmul.mubr.bf16.gmra.mrb[0].mxu0 %v244
        %v310 = vpop.f32.mrb[0].mxu0
        %v311 = vadd.f32 0.0, %v310
        %v312 = vpop.f32.mrb[0].mxu0
        %v313 = vpop.f32.mrb[0].mxu0
        %v314 = vadd.f32 0.0, %v313
        %v315 = vpop.f32.mrb[0].mxu0
        %316 = vmatprep.mubr.bf16.mxu0 0
        %317 = vmatmul.mubr.bf16.gmra.mrb[0].mxu0 %v247
        %v318 = vpop.f32.mrb[0].mxu0
        %v319 = vadd.f32 0.0, %v318
        %v320 = vpop.f32.mrb[0].mxu0
        %v321 = vpop.f32.mrb[0].mxu0
        %v322 = vadd.f32 0.0, %v321
        %v323 = vpop.f32.mrb[0].mxu0
        %324 = vmatprep.mubr.bf16.mxu0 0
        %325 = vmatmul.mubr.bf16.gmra.mrb[0].mxu0 %v250
        %v326 = vpop.f32.mrb[0].mxu0
        %v327 = vadd.f32 0.0, %v326
        %v328 = vpop.f32.mrb[0].mxu0
        %v329 = vpop.f32.mrb[0].mxu0
        %v330 = vadd.f32 0.0, %v329
        %v331 = vpop.f32.mrb[0].mxu0
        %332 = vmatprep.mubr.bf16.mxu0 0
        %333 = vmatmul.mubr.bf16.gmra.mrb[0].mxu0 %v253
        %v334 = vpop.f32.mrb[0].mxu0
        %v335 = vadd.f32 0.0, %v334
        %v336 = vpop.f32.mrb[0].mxu0
        %v337 = vpop.f32.mrb[0].mxu0
        %v338 = vadd.f32 0.0, %v337
        %v339 = vpop.f32.mrb[0].mxu0
        %340 = vmatprep.mubr.bf16.mxu0 0
        %341 = vmatmul.mubr.bf16.gmra.mrb[0].mxu0 %v256
        %v342 = vpop.f32.mrb[0].mxu0
        %v343 = vadd.f32 0.0, %v342
        %v344 = vpop.f32.mrb[0].mxu0
        %v345 = vpop.f32.mrb[0].mxu0
        %v346 = vadd.f32 0.0, %v345
        %v347 = vpop.f32.mrb[0].mxu0
        %348 = vmatprep.mubr.bf16.mxu0 0
        %349 = vmatmul.mubr.bf16.gmra.mrb[0].mxu0 %v259
        %v350 = vpop.f32.mrb[0].mxu0
        %v351 = vadd.f32 0.0, %v350
        %v352 = vpop.f32.mrb[0].mxu0
        %v353 = vpop.f32.mrb[0].mxu0
        %v354 = vadd.f32 0.0, %v353
        %v355 = vpop.f32.mrb[0].mxu0
        %356 = vmatprep.mubr.bf16.mxu0 0
        %357 = vmatmul.mubr.bf16.gmra.mrb[0].mxu0 %v262
        %v358 = vpop.f32.mrb[0].mxu0
        %v359 = vadd.f32 0.0, %v358
        %v360 = vpop.f32.mrb[0].mxu0
        %v361 = vpop.f32.mrb[0].mxu0
        %v362 = vadd.f32 0.0, %v361
        %v363 = vpop.f32.mrb[0].mxu0
        %364 = vdwg.mxu0
        %v366 = vsel %vm239, %v204, 0
        %v369 = vsel %vm239, %v205, 0
        %v372 = vsel %vm239, %v206, 0
        %v375 = vsel %vm239, %v207, 0
        %v378 = vsel %vm239, %v208, 0
        %v381 = vsel %vm239, %v209, 0
        %v384 = vsel %vm239, %v210, 0
        %v387 = vsel %vm239, %v211, 0
        %v390 = vsel %vm264, %v212, 0
        %392 = vmatprep.subr.bf16.mxu0 0
        %393 = vmatpush1.bf16.msra.mxu0 %v390
        %394 = vmatprep.subr.bf16.mxu0 0
        %395 = vmatpush1.bf16.msra.mxu0 0
        %396 = vmatprep.subr.bf16.mxu0 0
        %397 = vmatpush1.bf16.msra.mxu0 0
        %398 = vmatprep.subr.bf16.mxu0 0
        %399 = vmatpush1.bf16.msra.mxu0 0
        %400 = vmatprep.subr.bf16.mxu0 0
        %401 = vmatpush1.bf16.msra.mxu0 0
        %402 = vmatprep.subr.bf16.mxu0 0
        %403 = vmatpush1.bf16.msra.mxu0 0
        %404 = vmatprep.subr.bf16.mxu0 0
        %405 = vmatpush1.bf16.msra.mxu0 0
        %406 = vmatprep.subr.bf16.mxu0 0
        %407 = vmatpush1.bf16.msra.mxu0 0
        %408 = vmatprep.subr.bf16.mxu0 0
        %409 = vmatpush1.bf16.msra.mxu0 0
        %410 = vmatprep.subr.bf16.mxu0 0
        %411 = vmatpush1.bf16.msra.mxu0 0
        %412 = vmatprep.subr.bf16.mxu0 0
        %413 = vmatpush1.bf16.msra.mxu0 0
        %414 = vmatprep.subr.bf16.mxu0 0
        %415 = vmatpush1.bf16.msra.mxu0 0
        %416 = vmatprep.subr.bf16.mxu0 0
        %417 = vmatpush1.bf16.msra.mxu0 0
        %418 = vmatprep.subr.bf16.mxu0 0
        %419 = vmatpush1.bf16.msra.mxu0 0
        %420 = vmatprep.subr.bf16.mxu0 0
        %421 = vmatpush1.bf16.msra.mxu0 0
        %422 = vmatprep.subr.bf16.mxu0 0
        %423 = vmatpush1.bf16.msra.mxu0 0
        %424 = vmatprep.mubr.bf16.mxu0 0
        %425 = vmatmul.mubr.bf16.gmra.mrb[0].mxu0 %v366
        %v426 = vpop.f32.mrb[0].mxu0
        %v427 = vadd.f32 %v303, %v426
        %v428 = vpop.f32.mrb[0].mxu0
        %v429 = vpop.f32.mrb[0].mxu0
        %v430 = vadd.f32 %v306, %v429
        %v431 = vpop.f32.mrb[0].mxu0
        %432 = vmatprep.mubr.bf16.mxu0 0
        %433 = vmatmul.mubr.bf16.gmra.mrb[0].mxu0 %v369
        %v434 = vpop.f32.mrb[0].mxu0
        %v435 = vadd.f32 %v311, %v434
        %v436 = vpop.f32.mrb[0].mxu0
        %v437 = vpop.f32.mrb[0].mxu0
        %v438 = vadd.f32 %v314, %v437
        %v439 = vpop.f32.mrb[0].mxu0
        %440 = vmatprep.mubr.bf16.mxu0 0
        %441 = vmatmul.mubr.bf16.gmra.mrb[0].mxu0 %v372
        %v442 = vpop.f32.mrb[0].mxu0
        %v443 = vadd.f32 %v319, %v442
        %v444 = vpop.f32.mrb[0].mxu0
        %v445 = vpop.f32.mrb[0].mxu0
        %v446 = vadd.f32 %v322, %v445
        %v447 = vpop.f32.mrb[0].mxu0
        %448 = vmatprep.mubr.bf16.mxu0 0
        %449 = vmatmul.mubr.bf16.gmra.mrb[0].mxu0 %v375
        %v450 = vpop.f32.mrb[0].mxu0
        %v451 = vadd.f32 %v327, %v450
        %v452 = vpop.f32.mrb[0].mxu0
        %v453 = vpop.f32.mrb[0].mxu0
        %v454 = vadd.f32 %v330, %v453
        %v455 = vpop.f32.mrb[0].mxu0
        %456 = vmatprep.mubr.bf16.mxu0 0
        %457 = vmatmul.mubr.bf16.gmra.mrb[0].mxu0 %v378
        %v458 = vpop.f32.mrb[0].mxu0
        %v459 = vadd.f32 %v335, %v458
        %v460 = vpop.f32.mrb[0].mxu0
        %v461 = vpop.f32.mrb[0].mxu0
        %v462 = vadd.f32 %v338, %v461
        %v463 = vpop.f32.mrb[0].mxu0
        %464 = vmatprep.mubr.bf16.mxu0 0
        %465 = vmatmul.mubr.bf16.gmra.mrb[0].mxu0 %v381
        %v466 = vpop.f32.mrb[0].mxu0
        %v467 = vadd.f32 %v343, %v466
        %v468 = vpop.f32.mrb[0].mxu0
        %v469 = vpop.f32.mrb[0].mxu0
        %v470 = vadd.f32 %v346, %v469
        %v471 = vpop.f32.mrb[0].mxu0
        %472 = vmatprep.mubr.bf16.mxu0 0
        %473 = vmatmul.mubr.bf16.gmra.mrb[0].mxu0 %v384
        %v474 = vpop.f32.mrb[0].mxu0
        %v475 = vadd.f32 %v351, %v474
        %v476 = vpop.f32.mrb[0].mxu0
        %v477 = vpop.f32.mrb[0].mxu0
        %v478 = vadd.f32 %v354, %v477
        %v479 = vpop.f32.mrb[0].mxu0
        %480 = vmatprep.mubr.bf16.mxu0 0
        %481 = vmatmul.mubr.bf16.gmra.mrb[0].mxu0 %v387
        %v482 = vpop.f32.mrb[0].mxu0
        %v483 = vadd.f32 %v359, %v482
        %v484 = vpop.f32.mrb[0].mxu0
        %v485 = vpop.f32.mrb[0].mxu0
        %v486 = vadd.f32 %v362, %v485
        %v487 = vpop.f32.mrb[0].mxu0
        %488 = vdwg.mxu0
        %v489 = vld [vmem:[%s187 + $0x2] sm:$0xff]
        %v490 = vld [vmem:[%s187 + $0xa] sm:$0xff]
        %v491 = vld [vmem:[%s187 + $0x1a] sm:$0xff]
        %v492 = vld [vmem:[%s187 + $0x22] sm:$0xff]
        %v493 = vld [vmem:[%s187 + $0x32] sm:$0xff]
        %v494 = vld [vmem:[%s187 + $0x3a] sm:$0xff]
        %v495 = vld [vmem:[%s187 + $0x4a] sm:$0xff]
        %v496 = vld [vmem:[%s187 + $0x52] sm:$0xff]
        %v497 = vld [vmem:[%s187 + $0x62] sm:$0xff]
        %v498 = vld [vmem:[%s187 + $0x6a] sm:$0xff]
        %v499 = vld [vmem:[%s187 + $0x7a] sm:$0xff]
        %v500 = vld [vmem:[%s187 + $0x82] sm:$0xff]
        %v501 = vld [vmem:[%s187 + $0x92] sm:$0xff]
        %v502 = vld [vmem:[%s187 + $0x9a] sm:$0xff]
        %v503 = vld [vmem:[%s187 + $0xaa] sm:$0xff]
        %v504 = vld [vmem:[%s187 + $0xb2] sm:$0xff]
        %v505 = vpack.c.bf16 %v490, %v489
        %v506 = vpack.c.bf16 %v492, %v491
        %v507 = vpack.c.bf16 %v494, %v493
        %v508 = vpack.c.bf16 %v496, %v495
        %v509 = vpack.c.bf16 %v498, %v497
        %v510 = vpack.c.bf16 %v500, %v499
        %v511 = vpack.c.bf16 %v502, %v501
        %v512 = vpack.c.bf16 %v504, %v503
        %s513 = scalar_lea.vmem %s1, 4
        %v514 = vld [vmem:[%s513] sm:$0x3]
        %v516 = vsel %vm239, %v505, 0
        %v519 = vsel %vm239, %v506, 0
        %v522 = vsel %vm239, %v507, 0
        %v525 = vsel %vm239, %v508, 0
        %v528 = vsel %vm239, %v509, 0
        %v531 = vsel %vm239, %v510, 0
        %v534 = vsel %vm239, %v511, 0
        %v537 = vsel %vm239, %v512, 0
        %v540 = vsel %vm264, %v514, 0
        %542 = vmatprep.subr.bf16.mxu0 0
        %543 = vmatpush1.bf16.msra.mxu0 %v540
        %544 = vmatprep.subr.bf16.mxu0 0
        %545 = vmatpush1.bf16.msra.mxu0 0
        %546 = vmatprep.subr.bf16.mxu0 0
        %547 = vmatpush1.bf16.msra.mxu0 0
        %548 = vmatprep.subr.bf16.mxu0 0
        %549 = vmatpush1.bf16.msra.mxu0 0
        %550 = vmatprep.subr.bf16.mxu0 0
        %551 = vmatpush1.bf16.msra.mxu0 0
        %552 = vmatprep.subr.bf16.mxu0 0
        %553 = vmatpush1.bf16.msra.mxu0 0
        %554 = vmatprep.subr.bf16.mxu0 0
        %555 = vmatpush1.bf16.msra.mxu0 0
        %556 = vmatprep.subr.bf16.mxu0 0
        %557 = vmatpush1.bf16.msra.mxu0 0
        %558 = vmatprep.subr.bf16.mxu0 0
        %559 = vmatpush1.bf16.msra.mxu0 0
        %560 = vmatprep.subr.bf16.mxu0 0
        %561 = vmatpush1.bf16.msra.mxu0 0
        %562 = vmatprep.subr.bf16.mxu0 0
        %563 = vmatpush1.bf16.msra.mxu0 0
        %564 = vmatprep.subr.bf16.mxu0 0
        %565 = vmatpush1.bf16.msra.mxu0 0
        %566 = vmatprep.subr.bf16.mxu0 0
        %567 = vmatpush1.bf16.msra.mxu0 0
        %568 = vmatprep.subr.bf16.mxu0 0
        %569 = vmatpush1.bf16.msra.mxu0 0
        %570 = vmatprep.subr.bf16.mxu0 0
        %571 = vmatpush1.bf16.msra.mxu0 0
        %572 = vmatprep.subr.bf16.mxu0 0
        %573 = vmatpush1.bf16.msra.mxu0 0
        %574 = vmatprep.mubr.bf16.mxu0 0
        %575 = vmatmul.mubr.bf16.gmra.mrb[0].mxu0 %v516
        %v576 = vpop.f32.mrb[0].mxu0
        %v577 = vadd.f32 0.0, %v576
        %v578 = vpop.f32.mrb[0].mxu0
        %v579 = vpop.f32.mrb[0].mxu0
        %v580 = vadd.f32 0.0, %v579
        %v581 = vpop.f32.mrb[0].mxu0
        %582 = vmatprep.mubr.bf16.mxu0 0
        %583 = vmatmul.mubr.bf16.gmra.mrb[0].mxu0 %v519
        %v584 = vpop.f32.mrb[0].mxu0
        %v585 = vadd.f32 0.0, %v584
        %v586 = vpop.f32.mrb[0].mxu0
        %v587 = vpop.f32.mrb[0].mxu0
        %v588 = vadd.f32 0.0, %v587
        %v589 = vpop.f32.mrb[0].mxu0
        %590 = vmatprep.mubr.bf16.mxu0 0
        %591 = vmatmul.mubr.bf16.gmra.mrb[0].mxu0 %v522
        %v592 = vpop.f32.mrb[0].mxu0
        %v593 = vadd.f32 0.0, %v592
        %v594 = vpop.f32.mrb[0].mxu0
        %v595 = vpop.f32.mrb[0].mxu0
        %v596 = vadd.f32 0.0, %v595
        %v597 = vpop.f32.mrb[0].mxu0
        %598 = vmatprep.mubr.bf16.mxu0 0
        %599 = vmatmul.mubr.bf16.gmra.mrb[0].mxu0 %v525
        %v600 = vpop.f32.mrb[0].mxu0
        %v601 = vadd.f32 0.0, %v600
        %v602 = vpop.f32.mrb[0].mxu0
        %v603 = vpop.f32.mrb[0].mxu0
        %v604 = vadd.f32 0.0, %v603
        %v605 = vpop.f32.mrb[0].mxu0
        %606 = vmatprep.mubr.bf16.mxu0 0
        %607 = vmatmul.mubr.bf16.gmra.mrb[0].mxu0 %v528
        %v608 = vpop.f32.mrb[0].mxu0
        %v609 = vadd.f32 0.0, %v608
        %v610 = vpop.f32.mrb[0].mxu0
        %v611 = vpop.f32.mrb[0].mxu0
        %v612 = vadd.f32 0.0, %v611
        %v613 = vpop.f32.mrb[0].mxu0
        %614 = vmatprep.mubr.bf16.mxu0 0
        %615 = vmatmul.mubr.bf16.gmra.mrb[0].mxu0 %v531
        %v616 = vpop.f32.mrb[0].mxu0
        %v617 = vadd.f32 0.0, %v616
        %v618 = vpop.f32.mrb[0].mxu0
        %v619 = vpop.f32.mrb[0].mxu0
        %v620 = vadd.f32 0.0, %v619
        %v621 = vpop.f32.mrb[0].mxu0
        %622 = vmatprep.mubr.bf16.mxu0 0
        %623 = vmatmul.mubr.bf16.gmra.mrb[0].mxu0 %v534
        %v624 = vpop.f32.mrb[0].mxu0
        %v625 = vadd.f32 0.0, %v624
        %v626 = vpop.f32.mrb[0].mxu0
        %v627 = vpop.f32.mrb[0].mxu0
        %v628 = vadd.f32 0.0, %v627
        %v629 = vpop.f32.mrb[0].mxu0
        %630 = vmatprep.mubr.bf16.mxu0 0
        %631 = vmatmul.mubr.bf16.gmra.mrb[0].mxu0 %v537
        %v632 = vpop.f32.mrb[0].mxu0
        %v633 = vadd.f32 0.0, %v632
        %v634 = vpop.f32.mrb[0].mxu0
        %v635 = vpop.f32.mrb[0].mxu0
        %v636 = vadd.f32 0.0, %v635
        %v637 = vpop.f32.mrb[0].mxu0
        %638 = vdwg.mxu0
        %v639 = vadd.f32 %v427, %v577
        %v640 = vadd.f32 %v430, %v580
        %v641 = vadd.f32 %v435, %v585
        %v642 = vadd.f32 %v438, %v588
        %v643 = vadd.f32 %v443, %v593
        %v644 = vadd.f32 %v446, %v596
        %v645 = vadd.f32 %v451, %v601
        %v646 = vadd.f32 %v454, %v604
        %v647 = vadd.f32 %v459, %v609
        %v648 = vadd.f32 %v462, %v612
        %v649 = vadd.f32 %v467, %v617
        %v650 = vadd.f32 %v470, %v620
        %v651 = vadd.f32 %v475, %v625
        %v652 = vadd.f32 %v478, %v628
        %v653 = vadd.f32 %v483, %v633
        %v654 = vadd.f32 %v486, %v636
        %s655 = sadd.s32 %s185, 1
        %s656 = smul.u32 %s655, 24
        %s657 = scalar_lea.vmem %s182, %s656
        %v658 = vld [vmem:[%s657] sm:$0xff]
        %v659 = vld [vmem:[%s657 + $0x8] sm:$0xff]
        %v660 = vld [vmem:[%s657 + $0x18] sm:$0xff]
        %v661 = vld [vmem:[%s657 + $0x20] sm:$0xff]
        %v662 = vld [vmem:[%s657 + $0x30] sm:$0xff]
        %v663 = vld [vmem:[%s657 + $0x38] sm:$0xff]
        %v664 = vld [vmem:[%s657 + $0x48] sm:$0xff]
        %v665 = vld [vmem:[%s657 + $0x50] sm:$0xff]
        %v666 = vld [vmem:[%s657 + $0x60] sm:$0xff]
        %v667 = vld [vmem:[%s657 + $0x68] sm:$0xff]
        %v668 = vld [vmem:[%s657 + $0x78] sm:$0xff]
        %v669 = vld [vmem:[%s657 + $0x80] sm:$0xff]
        %v670 = vld [vmem:[%s657 + $0x90] sm:$0xff]
        %v671 = vld [vmem:[%s657 + $0x98] sm:$0xff]
        %v672 = vld [vmem:[%s657 + $0xa8] sm:$0xff]
        %v673 = vld [vmem:[%s657 + $0xb0] sm:$0xff]
        %v674 = vpack.c.bf16 %v659, %v658
        %v675 = vpack.c.bf16 %v661, %v660
        %v676 = vpack.c.bf16 %v663, %v662
        %v677 = vpack.c.bf16 %v665, %v664
        %v678 = vpack.c.bf16 %v667, %v666
        %v679 = vpack.c.bf16 %v669, %v668
        %v680 = vpack.c.bf16 %v671, %v670
        %v681 = vpack.c.bf16 %v673, %v672
        %s682 = scalar_lea.vmem %s1, 6
        %v683 = vld [vmem:[%s682] sm:$0x3]
        %v685 = vsel %vm239, %v674, 0
        %v688 = vsel %vm239, %v675, 0
        %v691 = vsel %vm239, %v676, 0
        %v694 = vsel %vm239, %v677, 0
        %v697 = vsel %vm239, %v678, 0
        %v700 = vsel %vm239, %v679, 0
        %v703 = vsel %vm239, %v680, 0
        %v706 = vsel %vm239, %v681, 0
        %v709 = vsel %vm264, %v683, 0
        %711 = vmatprep.subr.bf16.mxu0 0
        %712 = vmatpush1.bf16.msra.mxu0 %v709
        %713 = vmatprep.subr.bf16.mxu0 0
        %714 = vmatpush1.bf16.msra.mxu0 0
        %715 = vmatprep.subr.bf16.mxu0 0
        %716 = vmatpush1.bf16.msra.mxu0 0
        %717 = vmatprep.subr.bf16.mxu0 0
        %718 = vmatpush1.bf16.msra.mxu0 0
        %719 = vmatprep.subr.bf16.mxu0 0
        %720 = vmatpush1.bf16.msra.mxu0 0
        %721 = vmatprep.subr.bf16.mxu0 0
        %722 = vmatpush1.bf16.msra.mxu0 0
        %723 = vmatprep.subr.bf16.mxu0 0
        %724 = vmatpush1.bf16.msra.mxu0 0
        %725 = vmatprep.subr.bf16.mxu0 0
        %726 = vmatpush1.bf16.msra.mxu0 0
        %727 = vmatprep.subr.bf16.mxu0 0
        %728 = vmatpush1.bf16.msra.mxu0 0
        %729 = vmatprep.subr.bf16.mxu0 0
        %730 = vmatpush1.bf16.msra.mxu0 0
        %731 = vmatprep.subr.bf16.mxu0 0
        %732 = vmatpush1.bf16.msra.mxu0 0
        %733 = vmatprep.subr.bf16.mxu0 0
        %734 = vmatpush1.bf16.msra.mxu0 0
        %735 = vmatprep.subr.bf16.mxu0 0
        %736 = vmatpush1.bf16.msra.mxu0 0
        %737 = vmatprep.subr.bf16.mxu0 0
        %738 = vmatpush1.bf16.msra.mxu0 0
        %739 = vmatprep.subr.bf16.mxu0 0
        %740 = vmatpush1.bf16.msra.mxu0 0
        %741 = vmatprep.subr.bf16.mxu0 0
        %742 = vmatpush1.bf16.msra.mxu0 0
        %743 = vmatprep.mubr.bf16.mxu0 0
        %744 = vmatmul.mubr.bf16.gmra.mrb[0].mxu0 %v685
        %v745 = vpop.f32.mrb[0].mxu0
        %v746 = vadd.f32 0.0, %v745
        %v747 = vpop.f32.mrb[0].mxu0
        %v748 = vpop.f32.mrb[0].mxu0
        %v749 = vadd.f32 0.0, %v748
        %v750 = vpop.f32.mrb[0].mxu0
        %751 = vmatprep.mubr.bf16.mxu0 0
        %752 = vmatmul.mubr.bf16.gmra.mrb[0].mxu0 %v688
        %v753 = vpop.f32.mrb[0].mxu0
        %v754 = vadd.f32 0.0, %v753
        %v755 = vpop.f32.mrb[0].mxu0
        %v756 = vpop.f32.mrb[0].mxu0
        %v757 = vadd.f32 0.0, %v756
        %v758 = vpop.f32.mrb[0].mxu0
        %759 = vmatprep.mubr.bf16.mxu0 0
        %760 = vmatmul.mubr.bf16.gmra.mrb[0].mxu0 %v691
        %v761 = vpop.f32.mrb[0].mxu0
        %v762 = vadd.f32 0.0, %v761
        %v763 = vpop.f32.mrb[0].mxu0
        %v764 = vpop.f32.mrb[0].mxu0
        %v765 = vadd.f32 0.0, %v764
        %v766 = vpop.f32.mrb[0].mxu0
        %767 = vmatprep.mubr.bf16.mxu0 0
        %768 = vmatmul.mubr.bf16.gmra.mrb[0].mxu0 %v694
        %v769 = vpop.f32.mrb[0].mxu0
        %v770 = vadd.f32 0.0, %v769
        %v771 = vpop.f32.mrb[0].mxu0
        %v772 = vpop.f32.mrb[0].mxu0
        %v773 = vadd.f32 0.0, %v772
        %v774 = vpop.f32.mrb[0].mxu0
        %775 = vmatprep.mubr.bf16.mxu0 0
        %776 = vmatmul.mubr.bf16.gmra.mrb[0].mxu0 %v697
        %v777 = vpop.f32.mrb[0].mxu0
        %v778 = vadd.f32 0.0, %v777
        %v779 = vpop.f32.mrb[0].mxu0
        %v780 = vpop.f32.mrb[0].mxu0
        %v781 = vadd.f32 0.0, %v780
        %v782 = vpop.f32.mrb[0].mxu0
        %783 = vmatprep.mubr.bf16.mxu0 0
        %784 = vmatmul.mubr.bf16.gmra.mrb[0].mxu0 %v700
        %v785 = vpop.f32.mrb[0].mxu0
        %v786 = vadd.f32 0.0, %v785
        %v787 = vpop.f32.mrb[0].mxu0
        %v788 = vpop.f32.mrb[0].mxu0
        %v789 = vadd.f32 0.0, %v788
        %v790 = vpop.f32.mrb[0].mxu0
        %791 = vmatprep.mubr.bf16.mxu0 0
        %792 = vmatmul.mubr.bf16.gmra.mrb[0].mxu0 %v703
        %v793 = vpop.f32.mrb[0].mxu0
        %v794 = vadd.f32 0.0, %v793
        %v795 = vpop.f32.mrb[0].mxu0
        %v796 = vpop.f32.mrb[0].mxu0
        %v797 = vadd.f32 0.0, %v796
        %v798 = vpop.f32.mrb[0].mxu0
        %799 = vmatprep.mubr.bf16.mxu0 0
        %800 = vmatmul.mubr.bf16.gmra.mrb[0].mxu0 %v706
        %v801 = vpop.f32.mrb[0].mxu0
        %v802 = vadd.f32 0.0, %v801
        %v803 = vpop.f32.mrb[0].mxu0
        %v804 = vpop.f32.mrb[0].mxu0
        %v805 = vadd.f32 0.0, %v804
        %v806 = vpop.f32.mrb[0].mxu0
        %807 = vdwg.mxu0
        %v808 = vadd.f32 %v639, %v746
        %v809 = vadd.f32 %v640, %v749
        %v810 = vadd.f32 %v641, %v754
        %v811 = vadd.f32 %v642, %v757
        %v812 = vadd.f32 %v643, %v762
        %v813 = vadd.f32 %v644, %v765
        %v814 = vadd.f32 %v645, %v770
        %v815 = vadd.f32 %v646, %v773
        %v816 = vadd.f32 %v647, %v778
        %v817 = vadd.f32 %v648, %v781
        %v818 = vadd.f32 %v649, %v786
        %v819 = vadd.f32 %v650, %v789
        %v820 = vadd.f32 %v651, %v794
        %v821 = vadd.f32 %v652, %v797
        %v822 = vadd.f32 %v653, %v802
        %v823 = vadd.f32 %v654, %v805
        %v824 = vld [vmem:[%s657 + $0x1] sm:$0xff]
        %v825 = vld [vmem:[%s657 + $0x9] sm:$0xff]
        %v826 = vld [vmem:[%s657 + $0x19] sm:$0xff]
        %v827 = vld [vmem:[%s657 + $0x21] sm:$0xff]
        %v828 = vld [vmem:[%s657 + $0x31] sm:$0xff]
        %v829 = vld [vmem:[%s657 + $0x39] sm:$0xff]
        %v830 = vld [vmem:[%s657 + $0x49] sm:$0xff]
        %v831 = vld [vmem:[%s657 + $0x51] sm:$0xff]
        %v832 = vld [vmem:[%s657 + $0x61] sm:$0xff]
        %v833 = vld [vmem:[%s657 + $0x69] sm:$0xff]
        %v834 = vld [vmem:[%s657 + $0x79] sm:$0xff]
        %v835 = vld [vmem:[%s657 + $0x81] sm:$0xff]
        %v836 = vld [vmem:[%s657 + $0x91] sm:$0xff]
        %v837 = vld [vmem:[%s657 + $0x99] sm:$0xff]
        %v838 = vld [vmem:[%s657 + $0xa9] sm:$0xff]
        %v839 = vld [vmem:[%s657 + $0xb1] sm:$0xff]
        %v840 = vpack.c.bf16 %v825, %v824
        %v841 = vpack.c.bf16 %v827, %v826
        %v842 = vpack.c.bf16 %v829, %v828
        %v843 = vpack.c.bf16 %v831, %v830
        %v844 = vpack.c.bf16 %v833, %v832
        %v845 = vpack.c.bf16 %v835, %v834
        %v846 = vpack.c.bf16 %v837, %v836
        %v847 = vpack.c.bf16 %v839, %v838
        %s848 = scalar_lea.vmem %s1, 8
        %v849 = vld [vmem:[%s848] sm:$0x3]
        %v851 = vsel %vm239, %v840, 0
        %v854 = vsel %vm239, %v841, 0
        %v857 = vsel %vm239, %v842, 0
        %v860 = vsel %vm239, %v843, 0
        %v863 = vsel %vm239, %v844, 0
        %v866 = vsel %vm239, %v845, 0
        %v869 = vsel %vm239, %v846, 0
        %v872 = vsel %vm239, %v847, 0
        %v875 = vsel %vm264, %v849, 0
        %877 = vmatprep.subr.bf16.mxu0 0
        %878 = vmatpush1.bf16.msra.mxu0 %v875
        %879 = vmatprep.subr.bf16.mxu0 0
        %880 = vmatpush1.bf16.msra.mxu0 0
        %881 = vmatprep.subr.bf16.mxu0 0
        %882 = vmatpush1.bf16.msra.mxu0 0
        %883 = vmatprep.subr.bf16.mxu0 0
        %884 = vmatpush1.bf16.msra.mxu0 0
        %885 = vmatprep.subr.bf16.mxu0 0
        %886 = vmatpush1.bf16.msra.mxu0 0
        %887 = vmatprep.subr.bf16.mxu0 0
        %888 = vmatpush1.bf16.msra.mxu0 0
        %889 = vmatprep.subr.bf16.mxu0 0
        %890 = vmatpush1.bf16.msra.mxu0 0
        %891 = vmatprep.subr.bf16.mxu0 0
        %892 = vmatpush1.bf16.msra.mxu0 0
        %893 = vmatprep.subr.bf16.mxu0 0
        %894 = vmatpush1.bf16.msra.mxu0 0
        %895 = vmatprep.subr.bf16.mxu0 0
        %896 = vmatpush1.bf16.msra.mxu0 0
        %897 = vmatprep.subr.bf16.mxu0 0
        %898 = vmatpush1.bf16.msra.mxu0 0
        %899 = vmatprep.subr.bf16.mxu0 0
        %900 = vmatpush1.bf16.msra.mxu0 0
        %901 = vmatprep.subr.bf16.mxu0 0
        %902 = vmatpush1.bf16.msra.mxu0 0
        %903 = vmatprep.subr.bf16.mxu0 0
        %904 = vmatpush1.bf16.msra.mxu0 0
        %905 = vmatprep.subr.bf16.mxu0 0
        %906 = vmatpush1.bf16.msra.mxu0 0
        %907 = vmatprep.subr.bf16.mxu0 0
        %908 = vmatpush1.bf16.msra.mxu0 0
        %909 = vmatprep.mubr.bf16.mxu0 0
        %910 = vmatmul.mubr.bf16.gmra.mrb[0].mxu0 %v851
        %v911 = vpop.f32.mrb[0].mxu0
        %v912 = vadd.f32 0.0, %v911
        %v913 = vpop.f32.mrb[0].mxu0
        %v914 = vpop.f32.mrb[0].mxu0
        %v915 = vadd.f32 0.0, %v914
        %v916 = vpop.f32.mrb[0].mxu0
        %917 = vmatprep.mubr.bf16.mxu0 0
        %918 = vmatmul.mubr.bf16.gmra.mrb[0].mxu0 %v854
        %v919 = vpop.f32.mrb[0].mxu0
        %v920 = vadd.f32 0.0, %v919
        %v921 = vpop.f32.mrb[0].mxu0
        %v922 = vpop.f32.mrb[0].mxu0
        %v923 = vadd.f32 0.0, %v922
        %v924 = vpop.f32.mrb[0].mxu0
        %925 = vmatprep.mubr.bf16.mxu0 0
        %926 = vmatmul.mubr.bf16.gmra.mrb[0].mxu0 %v857
        %v927 = vpop.f32.mrb[0].mxu0
        %v928 = vadd.f32 0.0, %v927
        %v929 = vpop.f32.mrb[0].mxu0
        %v930 = vpop.f32.mrb[0].mxu0
        %v931 = vadd.f32 0.0, %v930
        %v932 = vpop.f32.mrb[0].mxu0
        %933 = vmatprep.mubr.bf16.mxu0 0
        %934 = vmatmul.mubr.bf16.gmra.mrb[0].mxu0 %v860
        %v935 = vpop.f32.mrb[0].mxu0
        %v936 = vadd.f32 0.0, %v935
        %v937 = vpop.f32.mrb[0].mxu0
        %v938 = vpop.f32.mrb[0].mxu0
        %v939 = vadd.f32 0.0, %v938
        %v940 = vpop.f32.mrb[0].mxu0
        %941 = vmatprep.mubr.bf16.mxu0 0
        %942 = vmatmul.mubr.bf16.gmra.mrb[0].mxu0 %v863
        %v943 = vpop.f32.mrb[0].mxu0
        %v944 = vadd.f32 0.0, %v943
        %v945 = vpop.f32.mrb[0].mxu0
        %v946 = vpop.f32.mrb[0].mxu0
        %v947 = vadd.f32 0.0, %v946
        %v948 = vpop.f32.mrb[0].mxu0
        %949 = vmatprep.mubr.bf16.mxu0 0
        %950 = vmatmul.mubr.bf16.gmra.mrb[0].mxu0 %v866
        %v951 = vpop.f32.mrb[0].mxu0
        %v952 = vadd.f32 0.0, %v951
        %v953 = vpop.f32.mrb[0].mxu0
        %v954 = vpop.f32.mrb[0].mxu0
        %v955 = vadd.f32 0.0, %v954
        %v956 = vpop.f32.mrb[0].mxu0
        %957 = vmatprep.mubr.bf16.mxu0 0
        %958 = vmatmul.mubr.bf16.gmra.mrb[0].mxu0 %v869
        %v959 = vpop.f32.mrb[0].mxu0
        %v960 = vadd.f32 0.0, %v959
        %v961 = vpop.f32.mrb[0].mxu0
        %v962 = vpop.f32.mrb[0].mxu0
        %v963 = vadd.f32 0.0, %v962
        %v964 = vpop.f32.mrb[0].mxu0
        %965 = vmatprep.mubr.bf16.mxu0 0
        %966 = vmatmul.mubr.bf16.gmra.mrb[0].mxu0 %v872
        %v967 = vpop.f32.mrb[0].mxu0
        %v968 = vadd.f32 0.0, %v967
        %v969 = vpop.f32.mrb[0].mxu0
        %v970 = vpop.f32.mrb[0].mxu0
        %v971 = vadd.f32 0.0, %v970
        %v972 = vpop.f32.mrb[0].mxu0
        %973 = vdwg.mxu0
        %v974 = vadd.f32 %v808, %v912
        %v975 = vadd.f32 %v809, %v915
        %v976 = vadd.f32 %v810, %v920
        %v977 = vadd.f32 %v811, %v923
        %v978 = vadd.f32 %v812, %v928
        %v979 = vadd.f32 %v813, %v931
        %v980 = vadd.f32 %v814, %v936
        %v981 = vadd.f32 %v815, %v939
        %v982 = vadd.f32 %v816, %v944
        %v983 = vadd.f32 %v817, %v947
        %v984 = vadd.f32 %v818, %v952
        %v985 = vadd.f32 %v819, %v955
        %v986 = vadd.f32 %v820, %v960
        %v987 = vadd.f32 %v821, %v963
        %v988 = vadd.f32 %v822, %v968
        %v989 = vadd.f32 %v823, %v971
        %v990 = vld [vmem:[%s657 + $0x2] sm:$0xff]
        %v991 = vld [vmem:[%s657 + $0xa] sm:$0xff]
        %v992 = vld [vmem:[%s657 + $0x1a] sm:$0xff]
        %v993 = vld [vmem:[%s657 + $0x22] sm:$0xff]
        %v994 = vld [vmem:[%s657 + $0x32] sm:$0xff]
        %v995 = vld [vmem:[%s657 + $0x3a] sm:$0xff]
        %v996 = vld [vmem:[%s657 + $0x4a] sm:$0xff]
        %v997 = vld [vmem:[%s657 + $0x52] sm:$0xff]
        %v998 = vld [vmem:[%s657 + $0x62] sm:$0xff]
        %v999 = vld [vmem:[%s657 + $0x6a] sm:$0xff]
        %v1000 = vld [vmem:[%s657 + $0x7a] sm:$0xff]
        %v1001 = vld [vmem:[%s657 + $0x82] sm:$0xff]
        %v1002 = vld [vmem:[%s657 + $0x92] sm:$0xff]
        %v1003 = vld [vmem:[%s657 + $0x9a] sm:$0xff]
        %v1004 = vld [vmem:[%s657 + $0xaa] sm:$0xff]
        %v1005 = vld [vmem:[%s657 + $0xb2] sm:$0xff]
        %v1006 = vpack.c.bf16 %v991, %v990
        %v1007 = vpack.c.bf16 %v993, %v992
        %v1008 = vpack.c.bf16 %v995, %v994
        %v1009 = vpack.c.bf16 %v997, %v996
        %v1010 = vpack.c.bf16 %v999, %v998
        %v1011 = vpack.c.bf16 %v1001, %v1000
        %v1012 = vpack.c.bf16 %v1003, %v1002
        %v1013 = vpack.c.bf16 %v1005, %v1004
        %s1014 = scalar_lea.vmem %s1, 10
        %v1015 = vld [vmem:[%s1014] sm:$0x3]
        %v1017 = vsel %vm239, %v1006, 0
        %v1020 = vsel %vm239, %v1007, 0
        %v1023 = vsel %vm239, %v1008, 0
        %v1026 = vsel %vm239, %v1009, 0
        %v1029 = vsel %vm239, %v1010, 0
        %v1032 = vsel %vm239, %v1011, 0
        %v1035 = vsel %vm239, %v1012, 0
        %v1038 = vsel %vm239, %v1013, 0
        %v1041 = vsel %vm264, %v1015, 0
        %1043 = vmatprep.subr.bf16.mxu0 0
        %1044 = vmatpush1.bf16.msra.mxu0 %v1041
        %1045 = vmatprep.subr.bf16.mxu0 0
        %1046 = vmatpush1.bf16.msra.mxu0 0
        %1047 = vmatprep.subr.bf16.mxu0 0
        %1048 = vmatpush1.bf16.msra.mxu0 0
        %1049 = vmatprep.subr.bf16.mxu0 0
        %1050 = vmatpush1.bf16.msra.mxu0 0
        %1051 = vmatprep.subr.bf16.mxu0 0
        %1052 = vmatpush1.bf16.msra.mxu0 0
        %1053 = vmatprep.subr.bf16.mxu0 0
        %1054 = vmatpush1.bf16.msra.mxu0 0
        %1055 = vmatprep.subr.bf16.mxu0 0
        %1056 = vmatpush1.bf16.msra.mxu0 0
        %1057 = vmatprep.subr.bf16.mxu0 0
        %1058 = vmatpush1.bf16.msra.mxu0 0
        %1059 = vmatprep.subr.bf16.mxu0 0
        %1060 = vmatpush1.bf16.msra.mxu0 0
        %1061 = vmatprep.subr.bf16.mxu0 0
        %1062 = vmatpush1.bf16.msra.mxu0 0
        %1063 = vmatprep.subr.bf16.mxu0 0
        %1064 = vmatpush1.bf16.msra.mxu0 0
        %1065 = vmatprep.subr.bf16.mxu0 0
        %1066 = vmatpush1.bf16.msra.mxu0 0
        %1067 = vmatprep.subr.bf16.mxu0 0
        %1068 = vmatpush1.bf16.msra.mxu0 0
        %1069 = vmatprep.subr.bf16.mxu0 0
        %1070 = vmatpush1.bf16.msra.mxu0 0
        %1071 = vmatprep.subr.bf16.mxu0 0
        %1072 = vmatpush1.bf16.msra.mxu0 0
        %1073 = vmatprep.subr.bf16.mxu0 0
        %1074 = vmatpush1.bf16.msra.mxu0 0
        %1075 = vmatprep.mubr.bf16.mxu0 0
        %1076 = vmatmul.mubr.bf16.gmra.mrb[0].mxu0 %v1017
        %v1077 = vpop.f32.mrb[0].mxu0
        %v1078 = vadd.f32 0.0, %v1077
        %v1079 = vpop.f32.mrb[0].mxu0
        %v1080 = vpop.f32.mrb[0].mxu0
        %v1081 = vadd.f32 0.0, %v1080
        %v1082 = vpop.f32.mrb[0].mxu0
        %1083 = vmatprep.mubr.bf16.mxu0 0
        %1084 = vmatmul.mubr.bf16.gmra.mrb[0].mxu0 %v1020
        %v1085 = vpop.f32.mrb[0].mxu0
        %v1086 = vadd.f32 0.0, %v1085
        %v1087 = vpop.f32.mrb[0].mxu0
        %v1088 = vpop.f32.mrb[0].mxu0
        %v1089 = vadd.f32 0.0, %v1088
        %v1090 = vpop.f32.mrb[0].mxu0
        %1091 = vmatprep.mubr.bf16.mxu0 0
        %1092 = vmatmul.mubr.bf16.gmra.mrb[0].mxu0 %v1023
        %v1093 = vpop.f32.mrb[0].mxu0
        %v1094 = vadd.f32 0.0, %v1093
        %v1095 = vpop.f32.mrb[0].mxu0
        %v1096 = vpop.f32.mrb[0].mxu0
        %v1097 = vadd.f32 0.0, %v1096
        %v1098 = vpop.f32.mrb[0].mxu0
        %1099 = vmatprep.mubr.bf16.mxu0 0
        %1100 = vmatmul.mubr.bf16.gmra.mrb[0].mxu0 %v1026
        %v1101 = vpop.f32.mrb[0].mxu0
        %v1102 = vadd.f32 0.0, %v1101
        %v1103 = vpop.f32.mrb[0].mxu0
        %v1104 = vpop.f32.mrb[0].mxu0
        %v1105 = vadd.f32 0.0, %v1104
        %v1106 = vpop.f32.mrb[0].mxu0
        %1107 = vmatprep.mubr.bf16.mxu0 0
        %1108 = vmatmul.mubr.bf16.gmra.mrb[0].mxu0 %v1029
        %v1109 = vpop.f32.mrb[0].mxu0
        %v1110 = vadd.f32 0.0, %v1109
        %v1111 = vpop.f32.mrb[0].mxu0
        %v1112 = vpop.f32.mrb[0].mxu0
        %v1113 = vadd.f32 0.0, %v1112
        %v1114 = vpop.f32.mrb[0].mxu0
        %1115 = vmatprep.mubr.bf16.mxu0 0
        %1116 = vmatmul.mubr.bf16.gmra.mrb[0].mxu0 %v1032
        %v1117 = vpop.f32.mrb[0].mxu0
        %v1118 = vadd.f32 0.0, %v1117
        %v1119 = vpop.f32.mrb[0].mxu0
        %v1120 = vpop.f32.mrb[0].mxu0
        %v1121 = vadd.f32 0.0, %v1120
        %v1122 = vpop.f32.mrb[0].mxu0
        %1123 = vmatprep.mubr.bf16.mxu0 0
        %1124 = vmatmul.mubr.bf16.gmra.mrb[0].mxu0 %v1035
        %v1125 = vpop.f32.mrb[0].mxu0
        %v1126 = vadd.f32 0.0, %v1125
        %v1127 = vpop.f32.mrb[0].mxu0
        %v1128 = vpop.f32.mrb[0].mxu0
        %v1129 = vadd.f32 0.0, %v1128
        %v1130 = vpop.f32.mrb[0].mxu0
        %1131 = vmatprep.mubr.bf16.mxu0 0
        %1132 = vmatmul.mubr.bf16.gmra.mrb[0].mxu0 %v1038
        %v1133 = vpop.f32.mrb[0].mxu0
        %v1134 = vadd.f32 0.0, %v1133
        %v1135 = vpop.f32.mrb[0].mxu0
        %v1136 = vpop.f32.mrb[0].mxu0
        %v1137 = vadd.f32 0.0, %v1136
        %v1138 = vpop.f32.mrb[0].mxu0
        %1139 = vdwg.mxu0
        %v1140 = vadd.f32 %v974, %v1078
        %v1141 = vadd.f32 %v975, %v1081
        %v1142 = vadd.f32 %v976, %v1086
        %v1143 = vadd.f32 %v977, %v1089
        %v1144 = vadd.f32 %v978, %v1094
        %v1145 = vadd.f32 %v979, %v1097
        %v1146 = vadd.f32 %v980, %v1102
        %v1147 = vadd.f32 %v981, %v1105
        %v1148 = vadd.f32 %v982, %v1110
        %v1149 = vadd.f32 %v983, %v1113
        %v1150 = vadd.f32 %v984, %v1118
        %v1151 = vadd.f32 %v985, %v1121
        %v1152 = vadd.f32 %v986, %v1126
        %v1153 = vadd.f32 %v987, %v1129
        %v1154 = vadd.f32 %v988, %v1134
        %v1155 = vadd.f32 %v989, %v1137
        %s1156 = sadd.s32 %s185, 2
        %s1157 = smul.u32 %s1156, 24
        %s1158 = scalar_lea.vmem %s182, %s1157
        %v1159 = vld [vmem:[%s1158] sm:$0xff]
        %v1160 = vld [vmem:[%s1158 + $0x8] sm:$0xff]
        %v1161 = vld [vmem:[%s1158 + $0x18] sm:$0xff]
        %v1162 = vld [vmem:[%s1158 + $0x20] sm:$0xff]
        %v1163 = vld [vmem:[%s1158 + $0x30] sm:$0xff]
        %v1164 = vld [vmem:[%s1158 + $0x38] sm:$0xff]
        %v1165 = vld [vmem:[%s1158 + $0x48] sm:$0xff]
        %v1166 = vld [vmem:[%s1158 + $0x50] sm:$0xff]
        %v1167 = vld [vmem:[%s1158 + $0x60] sm:$0xff]
        %v1168 = vld [vmem:[%s1158 + $0x68] sm:$0xff]
        %v1169 = vld [vmem:[%s1158 + $0x78] sm:$0xff]
        %v1170 = vld [vmem:[%s1158 + $0x80] sm:$0xff]
        %v1171 = vld [vmem:[%s1158 + $0x90] sm:$0xff]
        %v1172 = vld [vmem:[%s1158 + $0x98] sm:$0xff]
        %v1173 = vld [vmem:[%s1158 + $0xa8] sm:$0xff]
        %v1174 = vld [vmem:[%s1158 + $0xb0] sm:$0xff]
        %v1175 = vpack.c.bf16 %v1160, %v1159
        %v1176 = vpack.c.bf16 %v1162, %v1161
        %v1177 = vpack.c.bf16 %v1164, %v1163
        %v1178 = vpack.c.bf16 %v1166, %v1165
        %v1179 = vpack.c.bf16 %v1168, %v1167
        %v1180 = vpack.c.bf16 %v1170, %v1169
        %v1181 = vpack.c.bf16 %v1172, %v1171
        %v1182 = vpack.c.bf16 %v1174, %v1173
        %s1183 = scalar_lea.vmem %s1, 12
        %v1184 = vld [vmem:[%s1183] sm:$0x3]
        %v1186 = vsel %vm239, %v1175, 0
        %v1189 = vsel %vm239, %v1176, 0
        %v1192 = vsel %vm239, %v1177, 0
        %v1195 = vsel %vm239, %v1178, 0
        %v1198 = vsel %vm239, %v1179, 0
        %v1201 = vsel %vm239, %v1180, 0
        %v1204 = vsel %vm239, %v1181, 0
        %v1207 = vsel %vm239, %v1182, 0
        %v1210 = vsel %vm264, %v1184, 0
        %1212 = vmatprep.subr.bf16.mxu0 0
        %1213 = vmatpush1.bf16.msra.mxu0 %v1210
        %1214 = vmatprep.subr.bf16.mxu0 0
        %1215 = vmatpush1.bf16.msra.mxu0 0
        %1216 = vmatprep.subr.bf16.mxu0 0
        %1217 = vmatpush1.bf16.msra.mxu0 0
        %1218 = vmatprep.subr.bf16.mxu0 0
        %1219 = vmatpush1.bf16.msra.mxu0 0
        %1220 = vmatprep.subr.bf16.mxu0 0
        %1221 = vmatpush1.bf16.msra.mxu0 0
        %1222 = vmatprep.subr.bf16.mxu0 0
        %1223 = vmatpush1.bf16.msra.mxu0 0
        %1224 = vmatprep.subr.bf16.mxu0 0
        %1225 = vmatpush1.bf16.msra.mxu0 0
        %1226 = vmatprep.subr.bf16.mxu0 0
        %1227 = vmatpush1.bf16.msra.mxu0 0
        %1228 = vmatprep.subr.bf16.mxu0 0
        %1229 = vmatpush1.bf16.msra.mxu0 0
        %1230 = vmatprep.subr.bf16.mxu0 0
        %1231 = vmatpush1.bf16.msra.mxu0 0
        %1232 = vmatprep.subr.bf16.mxu0 0
        %1233 = vmatpush1.bf16.msra.mxu0 0
        %1234 = vmatprep.subr.bf16.mxu0 0
        %1235 = vmatpush1.bf16.msra.mxu0 0
        %1236 = vmatprep.subr.bf16.mxu0 0
        %1237 = vmatpush1.bf16.msra.mxu0 0
        %1238 = vmatprep.subr.bf16.mxu0 0
        %1239 = vmatpush1.bf16.msra.mxu0 0
        %1240 = vmatprep.subr.bf16.mxu0 0
        %1241 = vmatpush1.bf16.msra.mxu0 0
        %1242 = vmatprep.subr.bf16.mxu0 0
        %1243 = vmatpush1.bf16.msra.mxu0 0
        %1244 = vmatprep.mubr.bf16.mxu0 0
        %1245 = vmatmul.mubr.bf16.gmra.mrb[0].mxu0 %v1186
        %v1246 = vpop.f32.mrb[0].mxu0
        %v1247 = vadd.f32 0.0, %v1246
        %v1248 = vpop.f32.mrb[0].mxu0
        %v1249 = vpop.f32.mrb[0].mxu0
        %v1250 = vadd.f32 0.0, %v1249
        %v1251 = vpop.f32.mrb[0].mxu0
        %1252 = vmatprep.mubr.bf16.mxu0 0
        %1253 = vmatmul.mubr.bf16.gmra.mrb[0].mxu0 %v1189
        %v1254 = vpop.f32.mrb[0].mxu0
        %v1255 = vadd.f32 0.0, %v1254
        %v1256 = vpop.f32.mrb[0].mxu0
        %v1257 = vpop.f32.mrb[0].mxu0
        %v1258 = vadd.f32 0.0, %v1257
        %v1259 = vpop.f32.mrb[0].mxu0
        %1260 = vmatprep.mubr.bf16.mxu0 0
        %1261 = vmatmul.mubr.bf16.gmra.mrb[0].mxu0 %v1192
        %v1262 = vpop.f32.mrb[0].mxu0
        %v1263 = vadd.f32 0.0, %v1262
        %v1264 = vpop.f32.mrb[0].mxu0
        %v1265 = vpop.f32.mrb[0].mxu0
        %v1266 = vadd.f32 0.0, %v1265
        %v1267 = vpop.f32.mrb[0].mxu0
        %1268 = vmatprep.mubr.bf16.mxu0 0
        %1269 = vmatmul.mubr.bf16.gmra.mrb[0].mxu0 %v1195
        %v1270 = vpop.f32.mrb[0].mxu0
        %v1271 = vadd.f32 0.0, %v1270
        %v1272 = vpop.f32.mrb[0].mxu0
        %v1273 = vpop.f32.mrb[0].mxu0
        %v1274 = vadd.f32 0.0, %v1273
        %v1275 = vpop.f32.mrb[0].mxu0
        %1276 = vmatprep.mubr.bf16.mxu0 0
        %1277 = vmatmul.mubr.bf16.gmra.mrb[0].mxu0 %v1198
        %v1278 = vpop.f32.mrb[0].mxu0
        %v1279 = vadd.f32 0.0, %v1278
        %v1280 = vpop.f32.mrb[0].mxu0
        %v1281 = vpop.f32.mrb[0].mxu0
        %v1282 = vadd.f32 0.0, %v1281
        %v1283 = vpop.f32.mrb[0].mxu0
        %1284 = vmatprep.mubr.bf16.mxu0 0
        %1285 = vmatmul.mubr.bf16.gmra.mrb[0].mxu0 %v1201
        %v1286 = vpop.f32.mrb[0].mxu0
        %v1287 = vadd.f32 0.0, %v1286
        %v1288 = vpop.f32.mrb[0].mxu0
        %v1289 = vpop.f32.mrb[0].mxu0
        %v1290 = vadd.f32 0.0, %v1289
        %v1291 = vpop.f32.mrb[0].mxu0
        %1292 = vmatprep.mubr.bf16.mxu0 0
        %1293 = vmatmul.mubr.bf16.gmra.mrb[0].mxu0 %v1204
        %v1294 = vpop.f32.mrb[0].mxu0
        %v1295 = vadd.f32 0.0, %v1294
        %v1296 = vpop.f32.mrb[0].mxu0
        %v1297 = vpop.f32.mrb[0].mxu0
        %v1298 = vadd.f32 0.0, %v1297
        %v1299 = vpop.f32.mrb[0].mxu0
        %1300 = vmatprep.mubr.bf16.mxu0 0
        %1301 = vmatmul.mubr.bf16.gmra.mrb[0].mxu0 %v1207
        %v1302 = vpop.f32.mrb[0].mxu0
        %v1303 = vadd.f32 0.0, %v1302
        %v1304 = vpop.f32.mrb[0].mxu0
        %v1305 = vpop.f32.mrb[0].mxu0
        %v1306 = vadd.f32 0.0, %v1305
        %v1307 = vpop.f32.mrb[0].mxu0
        %1308 = vdwg.mxu0
        %v1309 = vadd.f32 %v1140, %v1247
        %v1310 = vadd.f32 %v1141, %v1250
        %v1311 = vadd.f32 %v1142, %v1255
        %v1312 = vadd.f32 %v1143, %v1258
        %v1313 = vadd.f32 %v1144, %v1263
        %v1314 = vadd.f32 %v1145, %v1266
        %v1315 = vadd.f32 %v1146, %v1271
        %v1316 = vadd.f32 %v1147, %v1274
        %v1317 = vadd.f32 %v1148, %v1279
        %v1318 = vadd.f32 %v1149, %v1282
        %v1319 = vadd.f32 %v1150, %v1287
        %v1320 = vadd.f32 %v1151, %v1290
        %v1321 = vadd.f32 %v1152, %v1295
        %v1322 = vadd.f32 %v1153, %v1298
        %v1323 = vadd.f32 %v1154, %v1303
        %v1324 = vadd.f32 %v1155, %v1306
        %v1325 = vld [vmem:[%s1158 + $0x1] sm:$0xff]
        %v1326 = vld [vmem:[%s1158 + $0x9] sm:$0xff]
        %v1327 = vld [vmem:[%s1158 + $0x19] sm:$0xff]
        %v1328 = vld [vmem:[%s1158 + $0x21] sm:$0xff]
        %v1329 = vld [vmem:[%s1158 + $0x31] sm:$0xff]
        %v1330 = vld [vmem:[%s1158 + $0x39] sm:$0xff]
        %v1331 = vld [vmem:[%s1158 + $0x49] sm:$0xff]
        %v1332 = vld [vmem:[%s1158 + $0x51] sm:$0xff]
        %v1333 = vld [vmem:[%s1158 + $0x61] sm:$0xff]
        %v1334 = vld [vmem:[%s1158 + $0x69] sm:$0xff]
        %v1335 = vld [vmem:[%s1158 + $0x79] sm:$0xff]
        %v1336 = vld [vmem:[%s1158 + $0x81] sm:$0xff]
        %v1337 = vld [vmem:[%s1158 + $0x91] sm:$0xff]
        %v1338 = vld [vmem:[%s1158 + $0x99] sm:$0xff]
        %v1339 = vld [vmem:[%s1158 + $0xa9] sm:$0xff]
        %v1340 = vld [vmem:[%s1158 + $0xb1] sm:$0xff]
        %v1341 = vpack.c.bf16 %v1326, %v1325
        %v1342 = vpack.c.bf16 %v1328, %v1327
        %v1343 = vpack.c.bf16 %v1330, %v1329
        %v1344 = vpack.c.bf16 %v1332, %v1331
        %v1345 = vpack.c.bf16 %v1334, %v1333
        %v1346 = vpack.c.bf16 %v1336, %v1335
        %v1347 = vpack.c.bf16 %v1338, %v1337
        %v1348 = vpack.c.bf16 %v1340, %v1339
        %s1349 = scalar_lea.vmem %s1, 14
        %v1350 = vld [vmem:[%s1349] sm:$0x3]
        %v1352 = vsel %vm239, %v1341, 0
        %v1355 = vsel %vm239, %v1342, 0
        %v1358 = vsel %vm239, %v1343, 0
        %v1361 = vsel %vm239, %v1344, 0
        %v1364 = vsel %vm239, %v1345, 0
        %v1367 = vsel %vm239, %v1346, 0
        %v1370 = vsel %vm239, %v1347, 0
        %v1373 = vsel %vm239, %v1348, 0
        %v1376 = vsel %vm264, %v1350, 0
        %1378 = vmatprep.subr.bf16.mxu0 0
        %1379 = vmatpush1.bf16.msra.mxu0 %v1376
        %1380 = vmatprep.subr.bf16.mxu0 0
        %1381 = vmatpush1.bf16.msra.mxu0 0
        %1382 = vmatprep.subr.bf16.mxu0 0
        %1383 = vmatpush1.bf16.msra.mxu0 0
        %1384 = vmatprep.subr.bf16.mxu0 0
        %1385 = vmatpush1.bf16.msra.mxu0 0
        %1386 = vmatprep.subr.bf16.mxu0 0
        %1387 = vmatpush1.bf16.msra.mxu0 0
        %1388 = vmatprep.subr.bf16.mxu0 0
        %1389 = vmatpush1.bf16.msra.mxu0 0
        %1390 = vmatprep.subr.bf16.mxu0 0
        %1391 = vmatpush1.bf16.msra.mxu0 0
        %1392 = vmatprep.subr.bf16.mxu0 0
        %1393 = vmatpush1.bf16.msra.mxu0 0
        %1394 = vmatprep.subr.bf16.mxu0 0
        %1395 = vmatpush1.bf16.msra.mxu0 0
        %1396 = vmatprep.subr.bf16.mxu0 0
        %1397 = vmatpush1.bf16.msra.mxu0 0
        %1398 = vmatprep.subr.bf16.mxu0 0
        %1399 = vmatpush1.bf16.msra.mxu0 0
        %1400 = vmatprep.subr.bf16.mxu0 0
        %1401 = vmatpush1.bf16.msra.mxu0 0
        %1402 = vmatprep.subr.bf16.mxu0 0
        %1403 = vmatpush1.bf16.msra.mxu0 0
        %1404 = vmatprep.subr.bf16.mxu0 0
        %1405 = vmatpush1.bf16.msra.mxu0 0
        %1406 = vmatprep.subr.bf16.mxu0 0
        %1407 = vmatpush1.bf16.msra.mxu0 0
        %1408 = vmatprep.subr.bf16.mxu0 0
        %1409 = vmatpush1.bf16.msra.mxu0 0
        %1410 = vmatprep.mubr.bf16.mxu0 0
        %1411 = vmatmul.mubr.bf16.gmra.mrb[0].mxu0 %v1352
        %v1412 = vpop.f32.mrb[0].mxu0
        %v1413 = vadd.f32 0.0, %v1412
        %v1414 = vpop.f32.mrb[0].mxu0
        %v1415 = vpop.f32.mrb[0].mxu0
        %v1416 = vadd.f32 0.0, %v1415
        %v1417 = vpop.f32.mrb[0].mxu0
        %1418 = vmatprep.mubr.bf16.mxu0 0
        %1419 = vmatmul.mubr.bf16.gmra.mrb[0].mxu0 %v1355
        %v1420 = vpop.f32.mrb[0].mxu0
        %v1421 = vadd.f32 0.0, %v1420
        %v1422 = vpop.f32.mrb[0].mxu0
        %v1423 = vpop.f32.mrb[0].mxu0
        %v1424 = vadd.f32 0.0, %v1423
        %v1425 = vpop.f32.mrb[0].mxu0
        %1426 = vmatprep.mubr.bf16.mxu0 0
        %1427 = vmatmul.mubr.bf16.gmra.mrb[0].mxu0 %v1358
        %v1428 = vpop.f32.mrb[0].mxu0
        %v1429 = vadd.f32 0.0, %v1428
        %v1430 = vpop.f32.mrb[0].mxu0
        %v1431 = vpop.f32.mrb[0].mxu0
        %v1432 = vadd.f32 0.0, %v1431
        %v1433 = vpop.f32.mrb[0].mxu0
        %1434 = vmatprep.mubr.bf16.mxu0 0
        %1435 = vmatmul.mubr.bf16.gmra.mrb[0].mxu0 %v1361
        %v1436 = vpop.f32.mrb[0].mxu0
        %v1437 = vadd.f32 0.0, %v1436
        %v1438 = vpop.f32.mrb[0].mxu0
        %v1439 = vpop.f32.mrb[0].mxu0
        %v1440 = vadd.f32 0.0, %v1439
        %v1441 = vpop.f32.mrb[0].mxu0
        %1442 = vmatprep.mubr.bf16.mxu0 0
        %1443 = vmatmul.mubr.bf16.gmra.mrb[0].mxu0 %v1364
        %v1444 = vpop.f32.mrb[0].mxu0
        %v1445 = vadd.f32 0.0, %v1444
        %v1446 = vpop.f32.mrb[0].mxu0
        %v1447 = vpop.f32.mrb[0].mxu0
        %v1448 = vadd.f32 0.0, %v1447
        %v1449 = vpop.f32.mrb[0].mxu0
        %1450 = vmatprep.mubr.bf16.mxu0 0
        %1451 = vmatmul.mubr.bf16.gmra.mrb[0].mxu0 %v1367
        %v1452 = vpop.f32.mrb[0].mxu0
        %v1453 = vadd.f32 0.0, %v1452
        %v1454 = vpop.f32.mrb[0].mxu0
        %v1455 = vpop.f32.mrb[0].mxu0
        %v1456 = vadd.f32 0.0, %v1455
        %v1457 = vpop.f32.mrb[0].mxu0
        %1458 = vmatprep.mubr.bf16.mxu0 0
        %1459 = vmatmul.mubr.bf16.gmra.mrb[0].mxu0 %v1370
        %v1460 = vpop.f32.mrb[0].mxu0
        %v1461 = vadd.f32 0.0, %v1460
        %v1462 = vpop.f32.mrb[0].mxu0
        %v1463 = vpop.f32.mrb[0].mxu0
        %v1464 = vadd.f32 0.0, %v1463
        %v1465 = vpop.f32.mrb[0].mxu0
        %1466 = vmatprep.mubr.bf16.mxu0 0
        %1467 = vmatmul.mubr.bf16.gmra.mrb[0].mxu0 %v1373
        %v1468 = vpop.f32.mrb[0].mxu0
        %v1469 = vadd.f32 0.0, %v1468
        %v1470 = vpop.f32.mrb[0].mxu0
        %v1471 = vpop.f32.mrb[0].mxu0
        %v1472 = vadd.f32 0.0, %v1471
        %v1473 = vpop.f32.mrb[0].mxu0
        %1474 = vdwg.mxu0
        %v1475 = vadd.f32 %v1309, %v1413
        %v1476 = vadd.f32 %v1310, %v1416
        %v1477 = vadd.f32 %v1311, %v1421
        %v1478 = vadd.f32 %v1312, %v1424
        %v1479 = vadd.f32 %v1313, %v1429
        %v1480 = vadd.f32 %v1314, %v1432
        %v1481 = vadd.f32 %v1315, %v1437
        %v1482 = vadd.f32 %v1316, %v1440
        %v1483 = vadd.f32 %v1317, %v1445
        %v1484 = vadd.f32 %v1318, %v1448
        %v1485 = vadd.f32 %v1319, %v1453
        %v1486 = vadd.f32 %v1320, %v1456
        %v1487 = vadd.f32 %v1321, %v1461
        %v1488 = vadd.f32 %v1322, %v1464
        %v1489 = vadd.f32 %v1323, %v1469
        %v1490 = vadd.f32 %v1324, %v1472
        %v1491 = vld [vmem:[%s1158 + $0x2] sm:$0xff]
        %v1492 = vld [vmem:[%s1158 + $0xa] sm:$0xff]
        %v1493 = vld [vmem:[%s1158 + $0x1a] sm:$0xff]
        %v1494 = vld [vmem:[%s1158 + $0x22] sm:$0xff]
        %v1495 = vld [vmem:[%s1158 + $0x32] sm:$0xff]
        %v1496 = vld [vmem:[%s1158 + $0x3a] sm:$0xff]
        %v1497 = vld [vmem:[%s1158 + $0x4a] sm:$0xff]
        %v1498 = vld [vmem:[%s1158 + $0x52] sm:$0xff]
        %v1499 = vld [vmem:[%s1158 + $0x62] sm:$0xff]
        %v1500 = vld [vmem:[%s1158 + $0x6a] sm:$0xff]
        %v1501 = vld [vmem:[%s1158 + $0x7a] sm:$0xff]
        %v1502 = vld [vmem:[%s1158 + $0x82] sm:$0xff]
        %v1503 = vld [vmem:[%s1158 + $0x92] sm:$0xff]
        %v1504 = vld [vmem:[%s1158 + $0x9a] sm:$0xff]
        %v1505 = vld [vmem:[%s1158 + $0xaa] sm:$0xff]
        %v1506 = vld [vmem:[%s1158 + $0xb2] sm:$0xff]
        %v1507 = vpack.c.bf16 %v1492, %v1491
        %v1508 = vpack.c.bf16 %v1494, %v1493
        %v1509 = vpack.c.bf16 %v1496, %v1495
        %v1510 = vpack.c.bf16 %v1498, %v1497
        %v1511 = vpack.c.bf16 %v1500, %v1499
        %v1512 = vpack.c.bf16 %v1502, %v1501
        %v1513 = vpack.c.bf16 %v1504, %v1503
        %v1514 = vpack.c.bf16 %v1506, %v1505
        %s1515 = scalar_lea.vmem %s1, 16
        %v1516 = vld [vmem:[%s1515] sm:$0x3]
        %v1518 = vsel %vm239, %v1507, 0
        %v1521 = vsel %vm239, %v1508, 0
        %v1524 = vsel %vm239, %v1509, 0
        %v1527 = vsel %vm239, %v1510, 0
        %v1530 = vsel %vm239, %v1511, 0
        %v1533 = vsel %vm239, %v1512, 0
        %v1536 = vsel %vm239, %v1513, 0
        %v1539 = vsel %vm239, %v1514, 0
        %v1542 = vsel %vm264, %v1516, 0
        %1544 = vmatprep.subr.bf16.mxu0 0
        %1545 = vmatpush1.bf16.msra.mxu0 %v1542
        %1546 = vmatprep.subr.bf16.mxu0 0
        %1547 = vmatpush1.bf16.msra.mxu0 0
        %1548 = vmatprep.subr.bf16.mxu0 0
        %1549 = vmatpush1.bf16.msra.mxu0 0
        %1550 = vmatprep.subr.bf16.mxu0 0
        %1551 = vmatpush1.bf16.msra.mxu0 0
        %1552 = vmatprep.subr.bf16.mxu0 0
        %1553 = vmatpush1.bf16.msra.mxu0 0
        %1554 = vmatprep.subr.bf16.mxu0 0
        %1555 = vmatpush1.bf16.msra.mxu0 0
        %1556 = vmatprep.subr.bf16.mxu0 0
        %1557 = vmatpush1.bf16.msra.mxu0 0
        %1558 = vmatprep.subr.bf16.mxu0 0
        %1559 = vmatpush1.bf16.msra.mxu0 0
        %1560 = vmatprep.subr.bf16.mxu0 0
        %1561 = vmatpush1.bf16.msra.mxu0 0
        %1562 = vmatprep.subr.bf16.mxu0 0
        %1563 = vmatpush1.bf16.msra.mxu0 0
        %1564 = vmatprep.subr.bf16.mxu0 0
        %1565 = vmatpush1.bf16.msra.mxu0 0
        %1566 = vmatprep.subr.bf16.mxu0 0
        %1567 = vmatpush1.bf16.msra.mxu0 0
        %1568 = vmatprep.subr.bf16.mxu0 0
        %1569 = vmatpush1.bf16.msra.mxu0 0
        %1570 = vmatprep.subr.bf16.mxu0 0
        %1571 = vmatpush1.bf16.msra.mxu0 0
        %1572 = vmatprep.subr.bf16.mxu0 0
        %1573 = vmatpush1.bf16.msra.mxu0 0
        %1574 = vmatprep.subr.bf16.mxu0 0
        %1575 = vmatpush1.bf16.msra.mxu0 0
        %1576 = vmatprep.mubr.bf16.mxu0 0
        %1577 = vmatmul.mubr.bf16.gmra.mrb[0].mxu0 %v1518
        %v1578 = vpop.f32.mrb[0].mxu0
        %v1579 = vadd.f32 0.0, %v1578
        %v1580 = vpop.f32.mrb[0].mxu0
        %v1581 = vpop.f32.mrb[0].mxu0
        %v1582 = vadd.f32 0.0, %v1581
        %v1583 = vpop.f32.mrb[0].mxu0
        %1584 = vmatprep.mubr.bf16.mxu0 0
        %1585 = vmatmul.mubr.bf16.gmra.mrb[0].mxu0 %v1521
        %v1586 = vpop.f32.mrb[0].mxu0
        %v1587 = vadd.f32 0.0, %v1586
        %v1588 = vpop.f32.mrb[0].mxu0
        %v1589 = vpop.f32.mrb[0].mxu0
        %v1590 = vadd.f32 0.0, %v1589
        %v1591 = vpop.f32.mrb[0].mxu0
        %1592 = vmatprep.mubr.bf16.mxu0 0
        %1593 = vmatmul.mubr.bf16.gmra.mrb[0].mxu0 %v1524
        %v1594 = vpop.f32.mrb[0].mxu0
        %v1595 = vadd.f32 0.0, %v1594
        %v1596 = vpop.f32.mrb[0].mxu0
        %v1597 = vpop.f32.mrb[0].mxu0
        %v1598 = vadd.f32 0.0, %v1597
        %v1599 = vpop.f32.mrb[0].mxu0
        %1600 = vmatprep.mubr.bf16.mxu0 0
        %1601 = vmatmul.mubr.bf16.gmra.mrb[0].mxu0 %v1527
        %v1602 = vpop.f32.mrb[0].mxu0
        %v1603 = vadd.f32 0.0, %v1602
        %v1604 = vpop.f32.mrb[0].mxu0
        %v1605 = vpop.f32.mrb[0].mxu0
        %v1606 = vadd.f32 0.0, %v1605
        %v1607 = vpop.f32.mrb[0].mxu0
        %1608 = vmatprep.mubr.bf16.mxu0 0
        %1609 = vmatmul.mubr.bf16.gmra.mrb[0].mxu0 %v1530
        %v1610 = vpop.f32.mrb[0].mxu0
        %v1611 = vadd.f32 0.0, %v1610
        %v1612 = vpop.f32.mrb[0].mxu0
        %v1613 = vpop.f32.mrb[0].mxu0
        %v1614 = vadd.f32 0.0, %v1613
        %v1615 = vpop.f32.mrb[0].mxu0
        %1616 = vmatprep.mubr.bf16.mxu0 0
        %1617 = vmatmul.mubr.bf16.gmra.mrb[0].mxu0 %v1533
        %v1618 = vpop.f32.mrb[0].mxu0
        %v1619 = vadd.f32 0.0, %v1618
        %v1620 = vpop.f32.mrb[0].mxu0
        %v1621 = vpop.f32.mrb[0].mxu0
        %v1622 = vadd.f32 0.0, %v1621
        %v1623 = vpop.f32.mrb[0].mxu0
        %1624 = vmatprep.mubr.bf16.mxu0 0
        %1625 = vmatmul.mubr.bf16.gmra.mrb[0].mxu0 %v1536
        %v1626 = vpop.f32.mrb[0].mxu0
        %v1627 = vadd.f32 0.0, %v1626
        %v1628 = vpop.f32.mrb[0].mxu0
        %v1629 = vpop.f32.mrb[0].mxu0
        %v1630 = vadd.f32 0.0, %v1629
        %v1631 = vpop.f32.mrb[0].mxu0
        %1632 = vmatprep.mubr.bf16.mxu0 0
        %1633 = vmatmul.mubr.bf16.gmra.mrb[0].mxu0 %v1539
        %v1634 = vpop.f32.mrb[0].mxu0
        %v1635 = vadd.f32 0.0, %v1634
        %v1636 = vpop.f32.mrb[0].mxu0
        %v1637 = vpop.f32.mrb[0].mxu0
        %v1638 = vadd.f32 0.0, %v1637
        %v1639 = vpop.f32.mrb[0].mxu0
        %1640 = vdwg.mxu0
        %v1641 = vadd.f32 %v1475, %v1579
        %v1642 = vadd.f32 %v1476, %v1582
        %v1643 = vadd.f32 %v1477, %v1587
        %v1644 = vadd.f32 %v1478, %v1590
        %v1645 = vadd.f32 %v1479, %v1595
        %v1646 = vadd.f32 %v1480, %v1598
        %v1647 = vadd.f32 %v1481, %v1603
        %v1648 = vadd.f32 %v1482, %v1606
        %v1649 = vadd.f32 %v1483, %v1611
        %v1650 = vadd.f32 %v1484, %v1614
        %v1651 = vadd.f32 %v1485, %v1619
        %v1652 = vadd.f32 %v1486, %v1622
        %v1653 = vadd.f32 %v1487, %v1627
        %v1654 = vadd.f32 %v1488, %v1630
        %v1655 = vadd.f32 %v1489, %v1635
        %v1656 = vadd.f32 %v1490, %v1638
        %v1657 = vld [vmem:[%s2] sm:$0x1]
        %v1659 = vlaneseq
        %v1660 = vshrl.u32 %v1659, 7
        %v1661 = vsub.s32 0, %v1660
        %v1662 = vrot.slane %v1657, %v1661
        %v1664 = vadd.f32 %v1641, %v1662
        %v1665 = vadd.f32 %v1642, %v1662
        %v1666 = vadd.f32 %v1643, %v1662
        %v1667 = vadd.f32 %v1644, %v1662
        %v1668 = vadd.f32 %v1645, %v1662
        %v1669 = vadd.f32 %v1646, %v1662
        %v1670 = vadd.f32 %v1647, %v1662
        %v1671 = vadd.f32 %v1648, %v1662
        %v1672 = vadd.f32 %v1649, %v1662
        %v1673 = vadd.f32 %v1650, %v1662
        %v1674 = vadd.f32 %v1651, %v1662
        %v1675 = vadd.f32 %v1652, %v1662
        %v1676 = vadd.f32 %v1653, %v1662
        %v1677 = vadd.f32 %v1654, %v1662
        %v1678 = vadd.f32 %v1655, %v1662
        %v1679 = vadd.f32 %v1656, %v1662
        %v1680 = vxor.u32 %v1664, 2147483648
        %v1681 = vxor.u32 %v1665, 2147483648
        %v1682 = vxor.u32 %v1666, 2147483648
        %v1683 = vxor.u32 %v1667, 2147483648
        %v1684 = vxor.u32 %v1668, 2147483648
        %v1685 = vxor.u32 %v1669, 2147483648
        %v1686 = vxor.u32 %v1670, 2147483648
        %v1687 = vxor.u32 %v1671, 2147483648
        %v1688 = vxor.u32 %v1672, 2147483648
        %v1689 = vxor.u32 %v1673, 2147483648
        %v1690 = vxor.u32 %v1674, 2147483648
        %v1691 = vxor.u32 %v1675, 2147483648
        %v1692 = vxor.u32 %v1676, 2147483648
        %v1693 = vxor.u32 %v1677, 2147483648
        %v1694 = vxor.u32 %v1678, 2147483648
        %v1695 = vxor.u32 %v1679, 2147483648
        %v1696 = vmul.f32 %v1680, 1.442695
        %v1697 = vpow.pop %v1696
        %v1698 = vmul.f32 %v1681, 1.442695
        %v1699 = vpow.pop %v1698
        %v1700 = vmul.f32 %v1682, 1.442695
        %v1701 = vpow.pop %v1700
        %v1702 = vmul.f32 %v1683, 1.442695
        %v1703 = vpow.pop %v1702
        %v1704 = vmul.f32 %v1684, 1.442695
        %v1705 = vpow.pop %v1704
        %v1706 = vmul.f32 %v1685, 1.442695
        %v1707 = vpow.pop %v1706
        %v1708 = vmul.f32 %v1686, 1.442695
        %v1709 = vpow.pop %v1708
        %v1710 = vmul.f32 %v1687, 1.442695
        %v1711 = vpow.pop %v1710
        %v1712 = vmul.f32 %v1688, 1.442695
        %v1713 = vpow.pop %v1712
        %v1714 = vmul.f32 %v1689, 1.442695
        %v1715 = vpow.pop %v1714
        %v1716 = vmul.f32 %v1690, 1.442695
        %v1717 = vpow.pop %v1716
        %v1718 = vmul.f32 %v1691, 1.442695
        %v1719 = vpow.pop %v1718
        %v1720 = vmul.f32 %v1692, 1.442695
        %v1721 = vpow.pop %v1720
        %v1722 = vmul.f32 %v1693, 1.442695
        %v1723 = vpow.pop %v1722
        %v1724 = vmul.f32 %v1694, 1.442695
        %v1725 = vpow.pop %v1724
        %v1726 = vmul.f32 %v1695, 1.442695
        %v1727 = vpow.pop %v1726
        %v1728 = vadd.f32 %v1697, 1.0
        %v1729 = vadd.f32 %v1699, 1.0
        %v1730 = vadd.f32 %v1701, 1.0
        %v1731 = vadd.f32 %v1703, 1.0
        %v1732 = vadd.f32 %v1705, 1.0
        %v1733 = vadd.f32 %v1707, 1.0
        %v1734 = vadd.f32 %v1709, 1.0
        %v1735 = vadd.f32 %v1711, 1.0
        %v1736 = vadd.f32 %v1713, 1.0
        %v1737 = vadd.f32 %v1715, 1.0
        %v1738 = vadd.f32 %v1717, 1.0
        %v1739 = vadd.f32 %v1719, 1.0
        %v1740 = vadd.f32 %v1721, 1.0
        %v1741 = vadd.f32 %v1723, 1.0
        %v1742 = vadd.f32 %v1725, 1.0
        %v1743 = vadd.f32 %v1727, 1.0
        %v1744 = vrcp.pop %v1728
        %v1745 = vmul.f32 1.0, %v1744
        %v1746 = vrcp.pop %v1729
        %v1747 = vmul.f32 1.0, %v1746
        %v1748 = vrcp.pop %v1730
        %v1749 = vmul.f32 1.0, %v1748
        %v1750 = vrcp.pop %v1731
        %v1751 = vmul.f32 1.0, %v1750
        %v1752 = vrcp.pop %v1732
        %v1753 = vmul.f32 1.0, %v1752
        %v1754 = vrcp.pop %v1733
        %v1755 = vmul.f32 1.0, %v1754
        %v1756 = vrcp.pop %v1734
        %v1757 = vmul.f32 1.0, %v1756
        %v1758 = vrcp.pop %v1735
        %v1759 = vmul.f32 1.0, %v1758
        %v1760 = vrcp.pop %v1736
        %v1761 = vmul.f32 1.0, %v1760
        %v1762 = vrcp.pop %v1737
        %v1763 = vmul.f32 1.0, %v1762
        %v1764 = vrcp.pop %v1738
        %v1765 = vmul.f32 1.0, %v1764
        %v1766 = vrcp.pop %v1739
        %v1767 = vmul.f32 1.0, %v1766
        %v1768 = vrcp.pop %v1740
        %v1769 = vmul.f32 1.0, %v1768
        %v1770 = vrcp.pop %v1741
        %v1771 = vmul.f32 1.0, %v1770
        %v1772 = vrcp.pop %v1742
        %v1773 = vmul.f32 1.0, %v1772
        %v1774 = vrcp.pop %v1743
        %v1775 = vmul.f32 1.0, %v1774
        %v1776 = vmul.f32 %v1664, %v1745
        %v1777 = vmul.f32 %v1665, %v1747
        %v1778 = vmul.f32 %v1666, %v1749
        %v1779 = vmul.f32 %v1667, %v1751
        %v1780 = vmul.f32 %v1668, %v1753
        %v1781 = vmul.f32 %v1669, %v1755
        %v1782 = vmul.f32 %v1670, %v1757
        %v1783 = vmul.f32 %v1671, %v1759
        %v1784 = vmul.f32 %v1672, %v1761
        %v1785 = vmul.f32 %v1673, %v1763
        %v1786 = vmul.f32 %v1674, %v1765
        %v1787 = vmul.f32 %v1675, %v1767
        %v1788 = vmul.f32 %v1676, %v1769
        %v1789 = vmul.f32 %v1677, %v1771
        %v1790 = vmul.f32 %v1678, %v1773
        %v1791 = vmul.f32 %v1679, %v1775
        %1792 = vst [vmem:[%s177] sm:$0xff] %v1776
        %1793 = vst [vmem:[%s177 + $0x8] sm:$0xff] %v1777
        %1794 = vst [vmem:[%s177 + $0x10] sm:$0xff] %v1778
        %1795 = vst [vmem:[%s177 + $0x18] sm:$0xff] %v1779
        %1796 = vst [vmem:[%s177 + $0x20] sm:$0xff] %v1780
        %1797 = vst [vmem:[%s177 + $0x28] sm:$0xff] %v1781
        %1798 = vst [vmem:[%s177 + $0x30] sm:$0xff] %v1782
        %1799 = vst [vmem:[%s177 + $0x38] sm:$0xff] %v1783
        %1800 = vst [vmem:[%s177 + $0x40] sm:$0xff] %v1784
        %1801 = vst [vmem:[%s177 + $0x48] sm:$0xff] %v1785
        %1802 = vst [vmem:[%s177 + $0x50] sm:$0xff] %v1786
        %1803 = vst [vmem:[%s177 + $0x58] sm:$0xff] %v1787
        %1804 = vst [vmem:[%s177 + $0x60] sm:$0xff] %v1788
        %1805 = vst [vmem:[%s177 + $0x68] sm:$0xff] %v1789
        %1806 = vst [vmem:[%s177 + $0x70] sm:$0xff] %v1790
        %1807 = vst [vmem:[%s177 + $0x78] sm:$0xff] %v1791
        %s1808 = sand.u32 %s107, 1
        %s1809 = scalar_lea.sflag [#allocation3], %s1808
        %s1810 = sand.u32 %s107, 1
        %s1811 = smul.addr %s1810, 128
        %s1812 = scalar_lea.vmem [#allocation2], %s1811
        // Predicated region
        $region33: #{tpu_custom_call.1} parent=31 // pred_check
          %p1813 = pneg %p117
        $region34: #{tpu_custom_call.1} parent=31 // pred_check_branch
          %1815 = sbr.rel (%p1813) target = $region36
        $region35: #{tpu_custom_call.1} parent=31 // pred_region
          %s1816 = smul.u32 16, %s22
          %s1818 = ssub.s32 2048, 2048
          %1819 = vsyncadd %s1809, %s1818
          %s1820 = smul.addr %s21, 32
          %s1821 = sadd.s32 %s1816, %s1820
          %s1822 = smul.addr %s1821, 128
          %s1823 = scalar_lea.hbm %s3, %s1822
          %s1824 = sshll.u32 %s1812, 4
          %s1825 = int_to_ptr.vmem [resolvable:$true] %s1824
          %1830 = dma.vmem_to_hbm [thread:$0]  %s1825, 2048, %s1823, %s1809, 128, 128, 8
        $region36: #{tpu_custom_call.1} parent=31 // pred_fallthru
          _
      $region32: #{tpu_custom_call.1} parent=5 // pred_fallthru
        _
      %p1831 = scmp.le.s32.totalorder 2, %s12
      // Predicated region
      $region37: #{tpu_custom_call.1} parent=5 // pred_check
        %p1832 = pneg %p1831
      $region38: #{tpu_custom_call.1} parent=5 // pred_check_branch
        %1834 = sbr.rel (%p1832) target = $region40
      $region39: #{tpu_custom_call.1} parent=5 // pred_region
        %s1835 = ssub.s32 %s12, 2
        // Predicated region
        $region41: #{tpu_custom_call.1} parent=39 // pred_check
          %p1836 = pneg %p123
        $region42: #{tpu_custom_call.1} parent=39 // pred_check_branch
          %1838 = sbr.rel (%p1836) target = $region44
        $region43: #{tpu_custom_call.1} parent=39 // pred_region
          %s1839 = sand.u32 %s108, 1
          %s1840 = scalar_lea.sflag [#allocation3], %s1839
          %s1841 = sand.u32 %s108, 1
          %s1842 = smul.addr %s1841, 128
          %s1843 = scalar_lea.vmem [#allocation2], %s1842
          %1844 = dma.done %s1840, 2048
        $region44: #{tpu_custom_call.1} parent=39 // pred_fallthru
          _
      $region40: #{tpu_custom_call.1} parent=5 // pred_fallthru
        _
    $region6: #{tpu_custom_call.1} parent=1 // loop_footer
      %s16 = sadd.s32 1, %s12
    $region7: #{tpu_custom_call.1} parent=1 // loop_footer_branch
      %11 = sbr.rel target = $region3
    $region8: #{tpu_custom_call.1} parent=1 // loop_exit
      _
    %1845 = vsyncpa [#allocation3], 1
    %s1846 = scalar_lea.sflag [#allocation3], 1
    %1847 = vsyncpa %s1846, 1

</llo_original>
